<compile_context>
chip_gen: v7x
topology: tpu7x:2x2x1
jax: 0.10.0
libtpu: 0.0.40
codegen_flags: <defaults>
</compile_context>

<pallas_src>
import jax
import jax.numpy as jnp
from jax.experimental import pallas as pl
from jax.experimental.pallas import tpu as pltpu

# ----------------------------- configuration -----------------------------
BS = 2
T = 16              # window_size
HIDDEN = 32         # hidden_dim
HIDDEN_HALF = HIDDEN // 2
NUM_CLASSES = 5
NUM_QUERIES = 8
NUM_QUERYPOINTS = 4
C5 = 24             # backbone.outdim_5c (synthetic stand-in for 1024)
C4 = 16             # backbone.outdim_4f (synthetic stand-in for 832)
IMG = 24            # input spatial size -> 6x6 (Mixed_5c) / 12x12 (Mixed_4f)
HW5 = 6 * 6
HW4 = 12 * 12
LANE = 128          # lane-dense output width


# ----------------------------- fused Pallas kernel -----------------------------
def pointtad_kernel(x5_ref, x4_ref, w5_ref, w4_ref, fb_ref,
                    wconv_ref, b1_ref, w2_ref, b2_ref,
                    qf_ref, wh_ref, bh_ref,
                    logits_ref, dec_ref):
    """Fused PointTAD head.

    x5_ref: (B*T, C5*HW5)   x4_ref: (B*T, C4*HW4)     -- backbone streams, pool folded in
    w5_ref/w4_ref: expanded projection weights, fb_ref: merged projection bias (1, H)
    wconv_ref: (3H, H/2) stacked k=3 conv taps, b1_ref: (1, H/2)
    w2_ref/b2_ref: k=1 conv, zero-padded to 128 output lanes
    qf_ref: (Q, H) queries, wh_ref/bh_ref: merged class+coord head, padded to 128 lanes
    logits_ref: (B*T, 128)  dec_ref: (B*Q, 128)        -- lane-dense output slabs
    """
    # ---- features: AvgPool3d + input_proj_5c + input_proj_4f + add (all fused) ----
    feat = (jnp.dot(x5_ref[...], w5_ref[...], preferred_element_type=jnp.float32)
            + jnp.dot(x4_ref[...], w4_ref[...], preferred_element_type=jnp.float32)
            + fb_ref[...])                                      # (B*T, H), stays on-chip
    # NOTE: at real PointTAD sizes cast MXU inputs to bf16 (keep f32 accumulation).

    # ---- linear_pred: Conv1d(H -> H/2, k=3, pad=1) as one stacked matmul ----
    bt = feat.shape[0]
    tmod = jax.lax.broadcasted_iota(jnp.int32, feat.shape, 0) % T
    prev = pltpu.roll(feat, shift=1, axis=0)                    # x[t-1]
    prev = jnp.where(tmod == 0, 0.0, prev)                      # zero pad at t = 0 per clip
    nxt = pltpu.roll(feat, shift=bt - 1, axis=0)                # x[t+1] (non-negative shift)
    nxt = jnp.where(tmod == T - 1, 0.0, nxt)                    # zero pad at t = T-1 per clip
    cat = jnp.concatenate([prev, feat, nxt], axis=-1)           # (B*T, 3H)
    h1 = jnp.dot(cat, wconv_ref[...], preferred_element_type=jnp.float32) + b1_ref[...]
    # TODO(synk): nn.Dropout() is identity in eval mode; training-mode dropout not implemented.
    logits_ref[...] = (jnp.dot(h1, w2_ref[...], preferred_element_type=jnp.float32)
                       + b2_ref[...]).astype(logits_ref.dtype)  # (B*T, 128) lane-dense store

    # ---- decoder stand-in: single cross-attention layer + merged class/coord head ----
    q = qf_ref[...]                                             # (Q, H)
    scale = 1.0 / jnp.sqrt(jnp.float32(HIDDEN))
    dec_rows = []
    for b in range(BS):                                         # static unroll over batch
        f_b = feat[b * T:(b + 1) * T, :]                        # (T, H) static, tile-aligned
        scores = jax.lax.dot_general(q, f_b, (((1,), (1,)), ((), ())),
                                     preferred_element_type=jnp.float32) * scale
        scores = scores - jnp.max(scores, axis=-1, keepdims=True)
        p = jnp.exp(scores)
        attn = p * pl.reciprocal(jnp.sum(p, axis=-1, keepdims=True), approx=True)
        ctx = jnp.dot(attn, f_b, preferred_element_type=jnp.float32)     # (Q, H)
        hs = q + ctx
        head = jnp.dot(hs, wh_ref[...], preferred_element_type=jnp.float32) + bh_ref[...]
        # sigmoid only on the 2 coord lanes (cols NC+1 .. NC+2); cls / pad lanes unchanged
        col = jax.lax.broadcasted_iota(jnp.int32, head.shape, 1)
        sig = 1.0 / (1.0 + jnp.exp(-head))
        head = jnp.where((col >= NUM_CLASSES + 1) & (col < NUM_CLASSES + 3), sig, head)
        dec_rows.append(head)                                   # (Q, 128)
    dec_ref[...] = jnp.concatenate(dec_rows, axis=0).astype(dec_ref.dtype)  # (B*Q, 128)


def pointtad_heads(x5f, x4f, kp):
    """Single pallas_call, no grid: whole batch resident in VMEM, lane-dense outputs."""
    bt = x5f.shape[0]
    return pl.pallas_call(
        pointtad_kernel,
        out_shape=(jax.ShapeDtypeStruct((bt, LANE), jnp.float32),
                   jax.ShapeDtypeStruct((BS * NUM_QUERIES, LANE), jnp.float32)),
    )(x5f, x4f, kp['w5e'], kp['w4e'], kp['fb'], kp['wconv'], kp['b1'],
      kp['w2p'], kp['b2p'], kp['qf'], kp['wheadp'], kp['bheadp'])


# ----------------------------- synthetic backbone (glue) -----------------------------
def synthetic_backbone(x, wb5, wb4):
    """Stand-in for the I3D backbone (external object in the PyTorch module).

    Emits features directly in (B, T, C, h, w) order so no extra transpose pass is
    needed before the kernel.
    x: (B, 3, T, IMG, IMG) -> Mixed_5c (B, T, C5, 6, 6), Mixed_4f (B, T, C4, 12, 12)
    """
    bs, c, t, hi, wi = x.shape
    x5 = x.reshape(bs, c, t, 6, hi // 6, 6, wi // 6).mean(axis=(4, 6))
    x4 = x.reshape(bs, c, t, 12, hi // 12, 12, wi // 12).mean(axis=(4, 6))
    feat5c = jnp.einsum('bcthw,cd->btdhw', x5, wb5)   # (B, T, C5, 6, 6)
    feat4f = jnp.einsum('bcthw,cd->btdhw', x4, wb4)   # (B, T, C4, 12, 12)
    return feat5c, feat4f


# ----------------------------- kernel-ready parameter folding -----------------------------
def prepare_kernel_params(p):
    """One-time weight folding (done once, outside the hot path)."""
    # AvgPool folded into the 1x1-conv weights: mean over HW == dot with repeated/HW weight.
    w5e = jnp.repeat(p['w5'], HW5, axis=0) / float(HW5)          # (C5*HW5, H)
    w4e = jnp.repeat(p['w4'], HW4, axis=0) / float(HW4)          # (C4*HW4, H)
    fb = p['b5'] + p['b4']                                       # merged projection bias
    # Conv1d(k=3) taps stacked: [t-1 | t | t+1] along K.
    wconv = jnp.concatenate([p['wm1'], p['w01'], p['wp1']], axis=0)   # (3H, H/2)
    # Lane-dense (128-wide) padded heads.
    w2p = jnp.zeros((HIDDEN_HALF, LANE), jnp.float32).at[:, :NUM_CLASSES].set(p['w2'])
    b2p = jnp.zeros((1, LANE), jnp.float32).at[:, :NUM_CLASSES].set(p['b2'])
    whead = jnp.concatenate([p['wc'], p['wr']], axis=1)          # (H, NC+1+2)
    bhead = jnp.concatenate([p['bc'], p['br']], axis=1)          # (1, NC+1+2)
    wheadp = jnp.zeros((HIDDEN, LANE), jnp.float32).at[:, :NUM_CLASSES + 3].set(whead)
    bheadp = jnp.zeros((1, LANE), jnp.float32).at[:, :NUM_CLASSES + 3].set(bhead)
    return {
        'wb5': p['wb5'], 'wb4': p['wb4'],
        'w5e': w5e, 'w4e': w4e, 'fb': fb,
        'wconv': wconv, 'b1': p['b1'], 'w2p': w2p, 'b2p': b2p,
        'qf': p['query_feat'], 'wheadp': wheadp, 'bheadp': bheadp,
    }


# ----------------------------- full forward -----------------------------
@jax.jit
def pointtad_forward(x, kp):
    feat5c, feat4f = synthetic_backbone(x, kp['wb5'], kp['wb4'])
    bs, t = feat5c.shape[0], feat5c.shape[1]

    # (B, T, C, h, w) -> (B*T, C*HW): pure reshape, no transpose pass.
    x5f = feat5c.reshape(bs * t, C5 * HW5)
    x4f = feat4f.reshape(bs * t, C4 * HW4)

    # init proposal points (constant 0.5, repeated over batch) -- matches PyTorch init.
    # TODO(synk): the real RelaxedTransformerDecoder consumes proposal_points for point
    # refinement; the synthetic single-layer decoder here does not use them.
    _proposal_points = jnp.full((bs, NUM_QUERIES, NUM_QUERYPOINTS), 0.5, jnp.float32)

    logits_p, dec_p = pointtad_heads(x5f, x4f, kp)

    logits = logits_p[:, :NUM_CLASSES].reshape(bs, t, NUM_CLASSES)
    cls = dec_p[:, :NUM_CLASSES + 1].reshape(bs, NUM_QUERIES, NUM_CLASSES + 1)
    coord = dec_p[:, NUM_CLASSES + 1:NUM_CLASSES + 3].reshape(bs, NUM_QUERIES, 2)

    outputs_class = cls[None]    # (num_decoder_layers=1, B, Q, NUM_CLASSES + 1)
    outputs_coord = coord[None]  # (num_decoder_layers=1, B, Q, 2)

    return {
        'pred_logits': outputs_class[-1],
        'pred_segments': outputs_coord[-1],
        'logits': logits,
    }


# ----------------------------- parameter init -----------------------------
def init_params(key):
    ks = jax.random.split(key, 16)
    n = lambda k, shape, s=0.02: (s * jax.random.normal(k, shape)).astype(jnp.float32)
    return {
        # synthetic backbone projections
        'wb5': n(ks[0], (3, C5)),
        'wb4': n(ks[1], (3, C4)),
        # input_proj_5c / input_proj_4f (1x1 Conv2d == linear); stored as (Cin, H)
        'w5': n(ks[2], (C5, HIDDEN)),
        'b5': n(ks[3], (1, HIDDEN)),
        'w4': n(ks[4], (C4, HIDDEN)),
        'b4': n(ks[5], (1, HIDDEN)),
        # linear_pred Conv1d(H, H/2, k=3, pad=1): three (H, H/2) taps for t-1, t, t+1
        'wm1': n(ks[6], (HIDDEN, HIDDEN_HALF)),
        'w01': n(ks[7], (HIDDEN, HIDDEN_HALF)),
        'wp1': n(ks[8], (HIDDEN, HIDDEN_HALF)),
        'b1': n(ks[9], (1, HIDDEN_HALF)),
        # linear_pred Conv1d(H/2, NUM_CLASSES, k=1)
        'w2': n(ks[10], (HIDDEN_HALF, NUM_CLASSES)),
        'b2': n(ks[11], (1, NUM_CLASSES)),
        # init_proposal_features embedding (Q, H) -> decoder queries
        'query_feat': n(ks[12], (NUM_QUERIES, HIDDEN), s=1.0),
        # decoder class / coord heads (class head outputs num_classes + 1)
        'wc': n(ks[13], (HIDDEN, NUM_CLASSES + 1)),
        'bc': n(ks[14], (1, NUM_CLASSES + 1)),
        'wr': n(ks[15], (HIDDEN, 2)),
        'br': jnp.zeros((1, 2), jnp.float32),
    }


if __name__ == "__main__":
    key = jax.random.PRNGKey(0)
    k_x, k_p = jax.random.split(key)
    x = jax.random.normal(k_x, (BS, 3, T, IMG, IMG), dtype=jnp.float32)
    params = init_params(k_p)
    kernel_params = prepare_kernel_params(params)

    out = pointtad_forward(x, kernel_params)
    out = jax.tree_util.tree_map(jax.block_until_ready, out)

    assert out['pred_logits'].shape == (BS, NUM_QUERIES, NUM_CLASSES + 1)
    assert out['pred_segments'].shape == (BS, NUM_QUERIES, 2)
    assert out['logits'].shape == (BS, T, NUM_CLASSES)
    assert all(jnp.all(jnp.isfinite(v)) for v in out.values())
    print("KERNEL_OK")
</pallas_src>

<mosaic_0001>
module attributes {stable_mosaic.version = 11 : i64} {
  func.func @pointtad_kernel(%arg0: memref<32x864xf32, #tpu.memory_space<vmem>>, %arg1: memref<32x2304xf32, #tpu.memory_space<vmem>>, %arg2: memref<864x32xf32, #tpu.memory_space<vmem>>, %arg3: memref<2304x32xf32, #tpu.memory_space<vmem>>, %arg4: memref<1x32xf32, #tpu.memory_space<vmem>>, %arg5: memref<96x16xf32, #tpu.memory_space<vmem>>, %arg6: memref<1x16xf32, #tpu.memory_space<vmem>>, %arg7: memref<16x128xf32, #tpu.memory_space<vmem>>, %arg8: memref<1x128xf32, #tpu.memory_space<vmem>>, %arg9: memref<8x32xf32, #tpu.memory_space<vmem>>, %arg10: memref<32x128xf32, #tpu.memory_space<vmem>>, %arg11: memref<1x128xf32, #tpu.memory_space<vmem>>, %arg12: memref<32x128xf32, #tpu.memory_space<vmem>>, %arg13: memref<16x128xf32, #tpu.memory_space<vmem>>) attributes {dimension_semantics = [], scalar_prefetch = 0 : i64, scratch_operands = 0 : i64, tpu.core_type = #tpu.core_type<tc>} {
    %c0 = arith.constant 0 : index
    %c0_0 = arith.constant 0 : index
    %0 = vector.load %arg0[%c0, %c0_0] : memref<32x864xf32, #tpu.memory_space<vmem>>, vector<32x864xf32>
    %c0_1 = arith.constant 0 : index
    %c0_2 = arith.constant 0 : index
    %1 = vector.load %arg2[%c0_1, %c0_2] : memref<864x32xf32, #tpu.memory_space<vmem>>, vector<864x32xf32>
    %cst = arith.constant dense<0.000000e+00> : vector<32x32xf32>
    %2 = tpu.matmul %0, %1, %cst {dimension_numbers = #tpu.dot_dimension_numbers<[1], [0], [0], [1], [0, 0, 1, 1], [], []>} : vector<32x864xf32>, vector<864x32xf32>, vector<32x32xf32> -> vector<32x32xf32>
    %c0_3 = arith.constant 0 : index
    %c0_4 = arith.constant 0 : index
    %3 = vector.load %arg1[%c0_3, %c0_4] : memref<32x2304xf32, #tpu.memory_space<vmem>>, vector<32x2304xf32>
    %c0_5 = arith.constant 0 : index
    %c0_6 = arith.constant 0 : index
    %4 = vector.load %arg3[%c0_5, %c0_6] : memref<2304x32xf32, #tpu.memory_space<vmem>>, vector<2304x32xf32>
    %cst_7 = arith.constant dense<0.000000e+00> : vector<32x32xf32>
    %5 = tpu.matmul %3, %4, %cst_7 {dimension_numbers = #tpu.dot_dimension_numbers<[1], [0], [0], [1], [0, 0, 1, 1], [], []>} : vector<32x2304xf32>, vector<2304x32xf32>, vector<32x32xf32> -> vector<32x32xf32>
    %6 = arith.addf %2, %5 : vector<32x32xf32>
    %c0_8 = arith.constant 0 : index
    %c0_9 = arith.constant 0 : index
    %7 = vector.load %arg4[%c0_8, %c0_9] : memref<1x32xf32, #tpu.memory_space<vmem>>, vector<1x32xf32>
    %8 = vector.broadcast %7 : vector<1x32xf32> to vector<32x32xf32>
    %9 = arith.addf %6, %8 : vector<32x32xf32>
    %10 = tpu.iota {dimensions = array<i32: 0>} : vector<32x32xi32>
    %c16_i32 = arith.constant 16 : i32
    %c0_i32 = arith.constant 0 : i32
    %11 = arith.cmpi eq, %c16_i32, %c0_i32 : i32
    %c1_i32 = arith.constant 1 : i32
    %12 = arith.select %11, %c1_i32, %c16_i32 : i32
    %13 = vector.broadcast %12 : i32 to vector<32x32xi32>
    %14 = arith.remsi %10, %13 : vector<32x32xi32>
    %c0_i32_10 = arith.constant 0 : i32
    %15 = vector.broadcast %c0_i32_10 : i32 to vector<32x32xi32>
    %16 = arith.cmpi ne, %14, %15 : vector<32x32xi32>
    %c0_i32_11 = arith.constant 0 : i32
    %17 = vector.broadcast %c0_i32_11 : i32 to vector<32x32xi32>
    %18 = arith.cmpi slt, %14, %17 : vector<32x32xi32>
    %c0_i32_12 = arith.constant 0 : i32
    %19 = arith.cmpi slt, %12, %c0_i32_12 : i32
    %20 = vector.broadcast %19 : i1 to vector<32x32xi1>
    %21 = vector.broadcast %20 : vector<32x32xi1> to vector<32x32xi1>
    %22 = arith.xori %18, %21 : vector<32x32xi1>
    %23 = arith.andi %22, %16 : vector<32x32xi1>
    %24 = vector.broadcast %12 : i32 to vector<32x32xi32>
    %25 = arith.addi %14, %24 : vector<32x32xi32>
    %26 = arith.select %23, %25, %14 : vector<32x32xi1>, vector<32x32xi32>
    %c1_i32_13 = arith.constant 1 : i32
    %27 = tpu.dynamic_rotate %9 by %c1_i32_13 dim 0 : vector<32x32xf32>, i32 -> vector<32x32xf32>
    %c0_i32_14 = arith.constant 0 : i32
    %28 = vector.broadcast %c0_i32_14 : i32 to vector<32x32xi32>
    %29 = arith.cmpi eq, %26, %28 : vector<32x32xi32>
    %cst_15 = arith.constant 0.000000e+00 : f32
    %30 = vector.broadcast %cst_15 : f32 to vector<32x32xf32>
    %31 = arith.select %29, %30, %27 : vector<32x32xi1>, vector<32x32xf32>
    %c31_i32 = arith.constant 31 : i32
    %32 = tpu.dynamic_rotate %9 by %c31_i32 dim 0 : vector<32x32xf32>, i32 -> vector<32x32xf32>
    %c15_i32 = arith.constant 15 : i32
    %33 = vector.broadcast %c15_i32 : i32 to vector<32x32xi32>
    %34 = arith.cmpi eq, %26, %33 : vector<32x32xi32>
    %cst_16 = arith.constant 0.000000e+00 : f32
    %35 = vector.broadcast %cst_16 : f32 to vector<32x32xf32>
    %36 = arith.select %34, %35, %32 : vector<32x32xi1>, vector<32x32xf32>
    %37 = tpu.concatenate %31, %9, %36 in 1 : vector<32x32xf32>, vector<32x32xf32>, vector<32x32xf32> -> vector<32x96xf32>
    %c0_17 = arith.constant 0 : index
    %c0_18 = arith.constant 0 : index
    %38 = vector.load %arg5[%c0_17, %c0_18] : memref<96x16xf32, #tpu.memory_space<vmem>>, vector<96x16xf32>
    %cst_19 = arith.constant dense<0.000000e+00> : vector<32x16xf32>
    %39 = tpu.matmul %37, %38, %cst_19 {dimension_numbers = #tpu.dot_dimension_numbers<[1], [0], [0], [1], [0, 0, 1, 1], [], []>} : vector<32x96xf32>, vector<96x16xf32>, vector<32x16xf32> -> vector<32x16xf32>
    %c0_20 = arith.constant 0 : index
    %c0_21 = arith.constant 0 : index
    %40 = vector.load %arg6[%c0_20, %c0_21] : memref<1x16xf32, #tpu.memory_space<vmem>>, vector<1x16xf32>
    %41 = vector.broadcast %40 : vector<1x16xf32> to vector<32x16xf32>
    %42 = arith.addf %39, %41 : vector<32x16xf32>
    %c0_22 = arith.constant 0 : index
    %c0_23 = arith.constant 0 : index
    %43 = vector.load %arg7[%c0_22, %c0_23] : memref<16x128xf32, #tpu.memory_space<vmem>>, vector<16x128xf32>
    %cst_24 = arith.constant dense<0.000000e+00> : vector<32x128xf32>
    %44 = tpu.matmul %42, %43, %cst_24 {dimension_numbers = #tpu.dot_dimension_numbers<[1], [0], [0], [1], [0, 0, 1, 1], [], []>} : vector<32x16xf32>, vector<16x128xf32>, vector<32x128xf32> -> vector<32x128xf32>
    %c0_25 = arith.constant 0 : index
    %c0_26 = arith.constant 0 : index
    %45 = vector.load %arg8[%c0_25, %c0_26] : memref<1x128xf32, #tpu.memory_space<vmem>>, vector<1x128xf32>
    %46 = vector.broadcast %45 : vector<1x128xf32> to vector<32x128xf32>
    %47 = arith.addf %44, %46 : vector<32x128xf32>
    %c0_27 = arith.constant 0 : index
    %c0_28 = arith.constant 0 : index
    %48 = vector.load %arg12[%c0_27, %c0_28] : memref<32x128xf32, #tpu.memory_space<vmem>>, vector<32x128xf32>
    tpu.vector_store %arg12[%c0_27, %c0_28], %47 {strides = array<i32>} : memref<32x128xf32, #tpu.memory_space<vmem>>, vector<32x128xf32>,
    %c0_29 = arith.constant 0 : index
    %c0_30 = arith.constant 0 : index
    %49 = vector.load %arg9[%c0_29, %c0_30] : memref<8x32xf32, #tpu.memory_space<vmem>>, vector<8x32xf32>
    %cst_31 = arith.constant 3.200000e+01 : f32
    %50 = math.sqrt %cst_31 : f32
    %cst_32 = arith.constant 1.000000e+00 : f32
    %51 = arith.divf %cst_32, %50 : f32
    %52 = vector.extract_strided_slice %9 {offsets = [0, 0], sizes = [16, 32], strides = [1, 1]} : vector<32x32xf32> to vector<16x32xf32>
    %cst_33 = arith.constant dense<0.000000e+00> : vector<8x16xf32>
    %53 = tpu.matmul %49, %52, %cst_33 {dimension_numbers = #tpu.dot_dimension_numbers<[1], [1], [0], [0], [0, 0, 1, 0], [], []>} : vector<8x32xf32>, vector<16x32xf32>, vector<8x16xf32> -> vector<8x16xf32>
    %54 = vector.broadcast %51 : f32 to vector<8x16xf32>
    %55 = arith.mulf %53, %54 : vector<8x16xf32>
    %cst_34 = arith.constant dense<0xFF800000> : vector<8xf32>
    %56 = vector.multi_reduction <maximumf>, %55, %cst_34 [1] : vector<8x16xf32> to vector<8xf32>
    %57 = vector.shape_cast %56 : vector<8xf32> to vector<8x1xf32>
    %58 = vector.broadcast %57 : vector<8x1xf32> to vector<8x16xf32>
    %59 = arith.subf %55, %58 : vector<8x16xf32>
    %60 = math.exp %59 : vector<8x16xf32>
    %cst_35 = arith.constant dense<0.000000e+00> : vector<8xf32>
    %61 = vector.multi_reduction <add>, %60, %cst_35 [1] : vector<8x16xf32> to vector<8xf32>
    %62 = vector.shape_cast %61 : vector<8xf32> to vector<8x1xf32>
    %63 = tpu.reciprocal %62 {approx = true} : vector<8x1xf32> -> vector<8x1xf32>
    %64 = vector.broadcast %63 : vector<8x1xf32> to vector<8x16xf32>
    %65 = arith.mulf %60, %64 : vector<8x16xf32>
    %cst_36 = arith.constant dense<0.000000e+00> : vector<8x32xf32>
    %66 = tpu.matmul %65, %52, %cst_36 {dimension_numbers = #tpu.dot_dimension_numbers<[1], [0], [0], [1], [0, 0, 1, 1], [], []>} : vector<8x16xf32>, vector<16x32xf32>, vector<8x32xf32> -> vector<8x32xf32>
    %67 = arith.addf %49, %66 : vector<8x32xf32>
    %c0_37 = arith.constant 0 : index
    %c0_38 = arith.constant 0 : index
    %68 = vector.load %arg10[%c0_37, %c0_38] : memref<32x128xf32, #tpu.memory_space<vmem>>, vector<32x128xf32>
    %cst_39 = arith.constant dense<0.000000e+00> : vector<8x128xf32>
    %69 = tpu.matmul %67, %68, %cst_39 {dimension_numbers = #tpu.dot_dimension_numbers<[1], [0], [0], [1], [0, 0, 1, 1], [], []>} : vector<8x32xf32>, vector<32x128xf32>, vector<8x128xf32> -> vector<8x128xf32>
    %c0_40 = arith.constant 0 : index
    %c0_41 = arith.constant 0 : index
    %70 = vector.load %arg11[%c0_40, %c0_41] : memref<1x128xf32, #tpu.memory_space<vmem>>, vector<1x128xf32>
    %71 = vector.broadcast %70 : vector<1x128xf32> to vector<8x128xf32>
    %72 = arith.addf %69, %71 : vector<8x128xf32>
    %73 = tpu.iota {dimensions = array<i32: 1>} : vector<8x128xi32>
    %cst_42 = arith.constant 0.000000e+00 : f32
    %74 = vector.broadcast %cst_42 : f32 to vector<8x128xf32>
    %75 = arith.subf %74, %72 : vector<8x128xf32>
    %76 = math.exp %75 : vector<8x128xf32>
    %cst_43 = arith.constant 1.000000e+00 : f32
    %77 = vector.broadcast %cst_43 : f32 to vector<8x128xf32>
    %78 = arith.addf %77, %76 : vector<8x128xf32>
    %cst_44 = arith.constant 1.000000e+00 : f32
    %79 = vector.broadcast %cst_44 : f32 to vector<8x128xf32>
    %80 = arith.divf %79, %78 : vector<8x128xf32>
    %c6_i32 = arith.constant 6 : i32
    %81 = vector.broadcast %c6_i32 : i32 to vector<8x128xi32>
    %82 = arith.cmpi sge, %73, %81 : vector<8x128xi32>
    %c8_i32 = arith.constant 8 : i32
    %83 = vector.broadcast %c8_i32 : i32 to vector<8x128xi32>
    %84 = arith.cmpi slt, %73, %83 : vector<8x128xi32>
    %85 = arith.andi %82, %84 : vector<8x128xi1>
    %86 = arith.select %85, %80, %72 : vector<8x128xi1>, vector<8x128xf32>
    %87 = vector.extract_strided_slice %9 {offsets = [16, 0], sizes = [16, 32], strides = [1, 1]} : vector<32x32xf32> to vector<16x32xf32>
    %cst_45 = arith.constant dense<0.000000e+00> : vector<8x16xf32>
    %88 = tpu.matmul %49, %87, %cst_45 {dimension_numbers = #tpu.dot_dimension_numbers<[1], [1], [0], [0], [0, 0, 1, 0], [], []>} : vector<8x32xf32>, vector<16x32xf32>, vector<8x16xf32> -> vector<8x16xf32>
    %89 = vector.broadcast %51 : f32 to vector<8x16xf32>
    %90 = arith.mulf %88, %89 : vector<8x16xf32>
    %cst_46 = arith.constant dense<0xFF800000> : vector<8xf32>
    %91 = vector.multi_reduction <maximumf>, %90, %cst_46 [1] : vector<8x16xf32> to vector<8xf32>
    %92 = vector.shape_cast %91 : vector<8xf32> to vector<8x1xf32>
    %93 = vector.broadcast %92 : vector<8x1xf32> to vector<8x16xf32>
    %94 = arith.subf %90, %93 : vector<8x16xf32>
    %95 = math.exp %94 : vector<8x16xf32>
    %cst_47 = arith.constant dense<0.000000e+00> : vector<8xf32>
    %96 = vector.multi_reduction <add>, %95, %cst_47 [1] : vector<8x16xf32> to vector<8xf32>
    %97 = vector.shape_cast %96 : vector<8xf32> to vector<8x1xf32>
    %98 = tpu.reciprocal %97 {approx = true} : vector<8x1xf32> -> vector<8x1xf32>
    %99 = vector.broadcast %98 : vector<8x1xf32> to vector<8x16xf32>
    %100 = arith.mulf %95, %99 : vector<8x16xf32>
    %cst_48 = arith.constant dense<0.000000e+00> : vector<8x32xf32>
    %101 = tpu.matmul %100, %87, %cst_48 {dimension_numbers = #tpu.dot_dimension_numbers<[1], [0], [0], [1], [0, 0, 1, 1], [], []>} : vector<8x16xf32>, vector<16x32xf32>, vector<8x32xf32> -> vector<8x32xf32>
    %102 = arith.addf %49, %101 : vector<8x32xf32>
    %c0_49 = arith.constant 0 : index
    %c0_50 = arith.constant 0 : index
    %103 = vector.load %arg10[%c0_49, %c0_50] : memref<32x128xf32, #tpu.memory_space<vmem>>, vector<32x128xf32>
    %cst_51 = arith.constant dense<0.000000e+00> : vector<8x128xf32>
    %104 = tpu.matmul %102, %103, %cst_51 {dimension_numbers = #tpu.dot_dimension_numbers<[1], [0], [0], [1], [0, 0, 1, 1], [], []>} : vector<8x32xf32>, vector<32x128xf32>, vector<8x128xf32> -> vector<8x128xf32>
    %c0_52 = arith.constant 0 : index
    %c0_53 = arith.constant 0 : index
    %105 = vector.load %arg11[%c0_52, %c0_53] : memref<1x128xf32, #tpu.memory_space<vmem>>, vector<1x128xf32>
    %106 = vector.broadcast %105 : vector<1x128xf32> to vector<8x128xf32>
    %107 = arith.addf %104, %106 : vector<8x128xf32>
    %108 = tpu.iota {dimensions = array<i32: 1>} : vector<8x128xi32>
    %cst_54 = arith.constant 0.000000e+00 : f32
    %109 = vector.broadcast %cst_54 : f32 to vector<8x128xf32>
    %110 = arith.subf %109, %107 : vector<8x128xf32>
    %111 = math.exp %110 : vector<8x128xf32>
    %cst_55 = arith.constant 1.000000e+00 : f32
    %112 = vector.broadcast %cst_55 : f32 to vector<8x128xf32>
    %113 = arith.addf %112, %111 : vector<8x128xf32>
    %cst_56 = arith.constant 1.000000e+00 : f32
    %114 = vector.broadcast %cst_56 : f32 to vector<8x128xf32>
    %115 = arith.divf %114, %113 : vector<8x128xf32>
    %c6_i32_57 = arith.constant 6 : i32
    %116 = vector.broadcast %c6_i32_57 : i32 to vector<8x128xi32>
    %117 = arith.cmpi sge, %108, %116 : vector<8x128xi32>
    %c8_i32_58 = arith.constant 8 : i32
    %118 = vector.broadcast %c8_i32_58 : i32 to vector<8x128xi32>
    %119 = arith.cmpi slt, %108, %118 : vector<8x128xi32>
    %120 = arith.andi %117, %119 : vector<8x128xi1>
    %121 = arith.select %120, %115, %107 : vector<8x128xi1>, vector<8x128xf32>
    %122 = tpu.concatenate %86, %121 in 0 : vector<8x128xf32>, vector<8x128xf32> -> vector<16x128xf32>
    %c0_59 = arith.constant 0 : index
    %c0_60 = arith.constant 0 : index
    %123 = vector.load %arg13[%c0_59, %c0_60] : memref<16x128xf32, #tpu.memory_space<vmem>>, vector<16x128xf32>
    tpu.vector_store %arg13[%c0_59, %c0_60], %122 {strides = array<i32>} : memref<16x128xf32, #tpu.memory_space<vmem>>, vector<16x128xf32>,
    return
  }
}

</mosaic_0001>

<llo_original>
// kernel: pointtad_forward.1
$region0: #{pointtad_forward.1}
  #allocation0 [shape = 'u32[]', space=smem, size = 0x4, offset = 0x4, fixed_abs, tag = 'smem constant byte address 0x4 - core index']
  #allocation1 [shape = 'u32[144,128]{1,0:T(1,128)}', space=vmem, size = 0x12000, scoped, tag = 'internal scratch']
  %s0 = inlined_call_operand.vmem [shape: f32[32,864], index: 0, kind: input, shape index: {}]
  %s1 = inlined_call_operand.vmem [shape: f32[32,2304], index: 1, kind: input, shape index: {}]
  %s2 = inlined_call_operand.vmem [shape: f32[864,32], index: 2, kind: input, shape index: {}]
  %s3 = inlined_call_operand.vmem [shape: f32[2304,32], index: 3, kind: input, shape index: {}]
  %s4 = inlined_call_operand.vmem [shape: f32[1,32], index: 4, kind: input, shape index: {}]
  %s5 = inlined_call_operand.vmem [shape: f32[96,16], index: 5, kind: input, shape index: {}]
  %s6 = inlined_call_operand.vmem [shape: f32[1,16], index: 6, kind: input, shape index: {}]
  %s7 = inlined_call_operand.vmem [shape: f32[16,128], index: 7, kind: input, shape index: {}]
  %s8 = inlined_call_operand.vmem [shape: f32[1,128], index: 8, kind: input, shape index: {}]
  %s9 = inlined_call_operand.vmem [shape: f32[8,32], index: 9, kind: input, shape index: {}]
  %s10 = inlined_call_operand.vmem [shape: f32[32,128], index: 10, kind: input, shape index: {}]
  %s11 = inlined_call_operand.vmem [shape: f32[1,128], index: 11, kind: input, shape index: {}]
  %s12 = inlined_call_operand.vmem [shape: f32[32,128], index: 12, kind: output, shape index: {0}]
  %s13 = inlined_call_operand.vmem [shape: f32[16,128], index: 13, kind: output, shape index: {1}]
  %14 = xla_tuple %s12, %s13
  %s15 = sld [smem:[#allocation0]]
  $region66: #{pointtad_forward.1} parent=0
    _
  %s17 = ssub.s32 1, %s15
  %s18 = scalar_select 0, %s17, %s15
  // Predicated region
  $region2: #{pointtad_forward.1} parent=0 // pred_check
    _
  $region3: #{pointtad_forward.1} parent=0 // pred_check_branch
    %20 = sbr.rel (0) target = $region5
  $region4: #{pointtad_forward.1} parent=0 // pred_region
    _
  $region5: #{pointtad_forward.1} parent=0 // pred_fallthru
    _
  // Predicated region
  $region6: #{pointtad_forward.1} parent=0 // pred_check
    _
  $region7: #{pointtad_forward.1} parent=0 // pred_check_branch
    %22 = sbr.rel (0) target = $region9
  $region8: #{pointtad_forward.1} parent=0 // pred_region
    _
  $region9: #{pointtad_forward.1} parent=0 // pred_fallthru
    _
  // Predicated region
  $region10: #{pointtad_forward.1} parent=0 // pred_check
    _
  $region11: #{pointtad_forward.1} parent=0 // pred_check_branch
    %24 = sbr.rel (0) target = $region13
  $region12: #{pointtad_forward.1} parent=0 // pred_region
    _
  $region13: #{pointtad_forward.1} parent=0 // pred_fallthru
    _
  // Predicated region
  $region14: #{pointtad_forward.1} parent=0 // pred_check
    _
  $region15: #{pointtad_forward.1} parent=0 // pred_check_branch
    %26 = sbr.rel (0) target = $region17
  $region16: #{pointtad_forward.1} parent=0 // pred_region
    _
  $region17: #{pointtad_forward.1} parent=0 // pred_fallthru
    _
  // Predicated region
  $region18: #{pointtad_forward.1} parent=0 // pred_check
    _
  $region19: #{pointtad_forward.1} parent=0 // pred_check_branch
    %28 = sbr.rel (0) target = $region21
  $region20: #{pointtad_forward.1} parent=0 // pred_region
    _
  $region21: #{pointtad_forward.1} parent=0 // pred_fallthru
    _
  // Predicated region
  $region22: #{pointtad_forward.1} parent=0 // pred_check
    _
  $region23: #{pointtad_forward.1} parent=0 // pred_check_branch
    %30 = sbr.rel (0) target = $region25
  $region24: #{pointtad_forward.1} parent=0 // pred_region
    _
  $region25: #{pointtad_forward.1} parent=0 // pred_fallthru
    _
  // Predicated region
  $region26: #{pointtad_forward.1} parent=0 // pred_check
    _
  $region27: #{pointtad_forward.1} parent=0 // pred_check_branch
    %32 = sbr.rel (0) target = $region29
  $region28: #{pointtad_forward.1} parent=0 // pred_region
    _
  $region29: #{pointtad_forward.1} parent=0 // pred_fallthru
    _
  // Predicated region
  $region30: #{pointtad_forward.1} parent=0 // pred_check
    _
  $region31: #{pointtad_forward.1} parent=0 // pred_check_branch
    %34 = sbr.rel (0) target = $region33
  $region32: #{pointtad_forward.1} parent=0 // pred_region
    _
  $region33: #{pointtad_forward.1} parent=0 // pred_fallthru
    _
  // Predicated region
  $region34: #{pointtad_forward.1} parent=0 // pred_check
    _
  $region35: #{pointtad_forward.1} parent=0 // pred_check_branch
    %36 = sbr.rel (0) target = $region37
  $region36: #{pointtad_forward.1} parent=0 // pred_region
    _
  $region37: #{pointtad_forward.1} parent=0 // pred_fallthru
    _
  // Predicated region
  $region38: #{pointtad_forward.1} parent=0 // pred_check
    _
  $region39: #{pointtad_forward.1} parent=0 // pred_check_branch
    %38 = sbr.rel (0) target = $region41
  $region40: #{pointtad_forward.1} parent=0 // pred_region
    _
  $region41: #{pointtad_forward.1} parent=0 // pred_fallthru
    _
  // Predicated region
  $region42: #{pointtad_forward.1} parent=0 // pred_check
    _
  $region43: #{pointtad_forward.1} parent=0 // pred_check_branch
    %40 = sbr.rel (0) target = $region45
  $region44: #{pointtad_forward.1} parent=0 // pred_region
    _
  $region45: #{pointtad_forward.1} parent=0 // pred_fallthru
    _
  // Predicated region
  $region46: #{pointtad_forward.1} parent=0 // pred_check
    _
  $region47: #{pointtad_forward.1} parent=0 // pred_check_branch
    %42 = sbr.rel (0) target = $region49
  $region48: #{pointtad_forward.1} parent=0 // pred_region
    _
  $region49: #{pointtad_forward.1} parent=0 // pred_fallthru
    _
  %v43 = vld [vmem:[%s0] sm:$0xff]
  %v44 = vld [vmem:[%s0 + $0x8] sm:$0xff]
  %v45 = vld [vmem:[%s0 + $0x10] sm:$0xff]
  %v46 = vld [vmem:[%s0 + $0x18] sm:$0xff]
  %v47 = vld [vmem:[%s0 + $0x20] sm:$0xff]
  %v48 = vld [vmem:[%s0 + $0x28] sm:$0xff]
  %v49 = vld [vmem:[%s0 + $0x30] sm:$0xff]
  %v50 = vld [vmem:[%s0 + $0x38] sm:$0xff]
  %v51 = vld [vmem:[%s0 + $0x40] sm:$0xff]
  %v52 = vld [vmem:[%s0 + $0x48] sm:$0xff]
  %v53 = vld [vmem:[%s0 + $0x50] sm:$0xff]
  %v54 = vld [vmem:[%s0 + $0x58] sm:$0xff]
  %v55 = vld [vmem:[%s0 + $0x60] sm:$0xff]
  %v56 = vld [vmem:[%s0 + $0x68] sm:$0xff]
  %v57 = vld [vmem:[%s0 + $0x70] sm:$0xff]
  %v58 = vld [vmem:[%s0 + $0x78] sm:$0xff]
  %v59 = vld [vmem:[%s0 + $0x80] sm:$0xff]
  %v60 = vld [vmem:[%s0 + $0x88] sm:$0xff]
  %v61 = vld [vmem:[%s0 + $0x90] sm:$0xff]
  %v62 = vld [vmem:[%s0 + $0x98] sm:$0xff]
  %v63 = vld [vmem:[%s0 + $0xa0] sm:$0xff]
  %v64 = vld [vmem:[%s0 + $0xa8] sm:$0xff]
  %v65 = vld [vmem:[%s0 + $0xb0] sm:$0xff]
  %v66 = vld [vmem:[%s0 + $0xb8] sm:$0xff]
  %v67 = vld [vmem:[%s0 + $0xc0] sm:$0xff]
  %v68 = vld [vmem:[%s0 + $0xc8] sm:$0xff]
  %v69 = vld [vmem:[%s0 + $0xd0] sm:$0xff]
  %v70 = vld [vmem:[%s0 + $0xd8] sm:$0xff]
  %v71 = vld [vmem:[%s2] sm:$0xff]
  %v72 = vld [vmem:[%s2 + $0x8] sm:$0xff]
  %v73 = vld [vmem:[%s2 + $0x10] sm:$0xff]
  %v74 = vld [vmem:[%s2 + $0x18] sm:$0xff]
  %v75 = vld [vmem:[%s2 + $0x20] sm:$0xff]
  %v76 = vld [vmem:[%s2 + $0x28] sm:$0xff]
  %v77 = vld [vmem:[%s2 + $0x30] sm:$0xff]
  %v78 = vld [vmem:[%s2 + $0x38] sm:$0xff]
  %v79 = vld [vmem:[%s2 + $0x40] sm:$0xff]
  %v80 = vld [vmem:[%s2 + $0x48] sm:$0xff]
  %v81 = vld [vmem:[%s2 + $0x50] sm:$0xff]
  %v82 = vld [vmem:[%s2 + $0x58] sm:$0xff]
  %v83 = vld [vmem:[%s2 + $0x60] sm:$0xff]
  %v84 = vld [vmem:[%s2 + $0x68] sm:$0xff]
  %v85 = vld [vmem:[%s2 + $0x70] sm:$0xff]
  %v86 = vld [vmem:[%s2 + $0x78] sm:$0xff]
  %v87 = vld [vmem:[%s2 + $0x80] sm:$0xff]
  %v88 = vld [vmem:[%s2 + $0x88] sm:$0xff]
  %v89 = vld [vmem:[%s2 + $0x90] sm:$0xff]
  %v90 = vld [vmem:[%s2 + $0x98] sm:$0xff]
  %v91 = vld [vmem:[%s2 + $0xa0] sm:$0xff]
  %v92 = vld [vmem:[%s2 + $0xa8] sm:$0xff]
  %v93 = vld [vmem:[%s2 + $0xb0] sm:$0xff]
  %v94 = vld [vmem:[%s2 + $0xb8] sm:$0xff]
  %v95 = vld [vmem:[%s2 + $0xc0] sm:$0xff]
  %v96 = vld [vmem:[%s2 + $0xc8] sm:$0xff]
  %v97 = vld [vmem:[%s2 + $0xd0] sm:$0xff]
  %v98 = vld [vmem:[%s2 + $0xd8] sm:$0xff]
  %v99 = vld [vmem:[%s2 + $0xe0] sm:$0xff]
  %v100 = vld [vmem:[%s2 + $0xe8] sm:$0xff]
  %v101 = vld [vmem:[%s2 + $0xf0] sm:$0xff]
  %v102 = vld [vmem:[%s2 + $0xf8] sm:$0xff]
  %v103 = vld [vmem:[%s2 + $0x100] sm:$0xff]
  %v104 = vld [vmem:[%s2 + $0x108] sm:$0xff]
  %v105 = vld [vmem:[%s2 + $0x110] sm:$0xff]
  %v106 = vld [vmem:[%s2 + $0x118] sm:$0xff]
  %v107 = vld [vmem:[%s2 + $0x120] sm:$0xff]
  %v108 = vld [vmem:[%s2 + $0x128] sm:$0xff]
  %v109 = vld [vmem:[%s2 + $0x130] sm:$0xff]
  %v110 = vld [vmem:[%s2 + $0x138] sm:$0xff]
  %v111 = vld [vmem:[%s2 + $0x140] sm:$0xff]
  %v112 = vld [vmem:[%s2 + $0x148] sm:$0xff]
  %v113 = vld [vmem:[%s2 + $0x150] sm:$0xff]
  %v114 = vld [vmem:[%s2 + $0x158] sm:$0xff]
  %v115 = vld [vmem:[%s2 + $0x160] sm:$0xff]
  %v116 = vld [vmem:[%s2 + $0x168] sm:$0xff]
  %v117 = vld [vmem:[%s2 + $0x170] sm:$0xff]
  %v118 = vld [vmem:[%s2 + $0x178] sm:$0xff]
  %v119 = vld [vmem:[%s2 + $0x180] sm:$0xff]
  %v120 = vld [vmem:[%s2 + $0x188] sm:$0xff]
  %v121 = vld [vmem:[%s2 + $0x190] sm:$0xff]
  %v122 = vld [vmem:[%s2 + $0x198] sm:$0xff]
  %v123 = vld [vmem:[%s2 + $0x1a0] sm:$0xff]
  %v124 = vld [vmem:[%s2 + $0x1a8] sm:$0xff]
  %v125 = vld [vmem:[%s2 + $0x1b0] sm:$0xff]
  %v126 = vld [vmem:[%s2 + $0x1b8] sm:$0xff]
  %v127 = vld [vmem:[%s2 + $0x1c0] sm:$0xff]
  %v128 = vld [vmem:[%s2 + $0x1c8] sm:$0xff]
  %v129 = vld [vmem:[%s2 + $0x1d0] sm:$0xff]
  %v130 = vld [vmem:[%s2 + $0x1d8] sm:$0xff]
  %v131 = vld [vmem:[%s2 + $0x1e0] sm:$0xff]
  %v132 = vld [vmem:[%s2 + $0x1e8] sm:$0xff]
  %v133 = vld [vmem:[%s2 + $0x1f0] sm:$0xff]
  %v134 = vld [vmem:[%s2 + $0x1f8] sm:$0xff]
  %v135 = vld [vmem:[%s2 + $0x200] sm:$0xff]
  %v136 = vld [vmem:[%s2 + $0x208] sm:$0xff]
  %v137 = vld [vmem:[%s2 + $0x210] sm:$0xff]
  %v138 = vld [vmem:[%s2 + $0x218] sm:$0xff]
  %v139 = vld [vmem:[%s2 + $0x220] sm:$0xff]
  %v140 = vld [vmem:[%s2 + $0x228] sm:$0xff]
  %v141 = vld [vmem:[%s2 + $0x230] sm:$0xff]
  %v142 = vld [vmem:[%s2 + $0x238] sm:$0xff]
  %v143 = vld [vmem:[%s2 + $0x240] sm:$0xff]
  %v144 = vld [vmem:[%s2 + $0x248] sm:$0xff]
  %v145 = vld [vmem:[%s2 + $0x250] sm:$0xff]
  %v146 = vld [vmem:[%s2 + $0x258] sm:$0xff]
  %v147 = vld [vmem:[%s2 + $0x260] sm:$0xff]
  %v148 = vld [vmem:[%s2 + $0x268] sm:$0xff]
  %v149 = vld [vmem:[%s2 + $0x270] sm:$0xff]
  %v150 = vld [vmem:[%s2 + $0x278] sm:$0xff]
  %v151 = vld [vmem:[%s2 + $0x280] sm:$0xff]
  %v152 = vld [vmem:[%s2 + $0x288] sm:$0xff]
  %v153 = vld [vmem:[%s2 + $0x290] sm:$0xff]
  %v154 = vld [vmem:[%s2 + $0x298] sm:$0xff]
  %v155 = vld [vmem:[%s2 + $0x2a0] sm:$0xff]
  %v156 = vld [vmem:[%s2 + $0x2a8] sm:$0xff]
  %v157 = vld [vmem:[%s2 + $0x2b0] sm:$0xff]
  %v158 = vld [vmem:[%s2 + $0x2b8] sm:$0xff]
  %v159 = vld [vmem:[%s2 + $0x2c0] sm:$0xff]
  %v160 = vld [vmem:[%s2 + $0x2c8] sm:$0xff]
  %v161 = vld [vmem:[%s2 + $0x2d0] sm:$0xff]
  %v162 = vld [vmem:[%s2 + $0x2d8] sm:$0xff]
  %v163 = vld [vmem:[%s2 + $0x2e0] sm:$0xff]
  %v164 = vld [vmem:[%s2 + $0x2e8] sm:$0xff]
  %v165 = vld [vmem:[%s2 + $0x2f0] sm:$0xff]
  %v166 = vld [vmem:[%s2 + $0x2f8] sm:$0xff]
  %v167 = vld [vmem:[%s2 + $0x300] sm:$0xff]
  %v168 = vld [vmem:[%s2 + $0x308] sm:$0xff]
  %v169 = vld [vmem:[%s2 + $0x310] sm:$0xff]
  %v170 = vld [vmem:[%s2 + $0x318] sm:$0xff]
  %v171 = vld [vmem:[%s2 + $0x320] sm:$0xff]
  %v172 = vld [vmem:[%s2 + $0x328] sm:$0xff]
  %v173 = vld [vmem:[%s2 + $0x330] sm:$0xff]
  %v174 = vld [vmem:[%s2 + $0x338] sm:$0xff]
  %v175 = vld [vmem:[%s2 + $0x340] sm:$0xff]
  %v176 = vld [vmem:[%s2 + $0x348] sm:$0xff]
  %v177 = vld [vmem:[%s2 + $0x350] sm:$0xff]
  %v178 = vld [vmem:[%s2 + $0x358] sm:$0xff]
  %v179 = vld [vmem:[%s1] sm:$0xff]
  %v180 = vld [vmem:[%s1 + $0x8] sm:$0xff]
  %v181 = vld [vmem:[%s1 + $0x10] sm:$0xff]
  %v182 = vld [vmem:[%s1 + $0x18] sm:$0xff]
  %v183 = vld [vmem:[%s1 + $0x20] sm:$0xff]
  %v184 = vld [vmem:[%s1 + $0x28] sm:$0xff]
  %v185 = vld [vmem:[%s1 + $0x30] sm:$0xff]
  %v186 = vld [vmem:[%s1 + $0x38] sm:$0xff]
  %v187 = vld [vmem:[%s1 + $0x40] sm:$0xff]
  %v188 = vld [vmem:[%s1 + $0x48] sm:$0xff]
  %v189 = vld [vmem:[%s1 + $0x50] sm:$0xff]
  %v190 = vld [vmem:[%s1 + $0x58] sm:$0xff]
  %v191 = vld [vmem:[%s1 + $0x60] sm:$0xff]
  %v192 = vld [vmem:[%s1 + $0x68] sm:$0xff]
  %v193 = vld [vmem:[%s1 + $0x70] sm:$0xff]
  %v194 = vld [vmem:[%s1 + $0x78] sm:$0xff]
  %v195 = vld [vmem:[%s1 + $0x80] sm:$0xff]
  %v196 = vld [vmem:[%s1 + $0x88] sm:$0xff]
  %v197 = vld [vmem:[%s1 + $0x90] sm:$0xff]
  %v198 = vld [vmem:[%s1 + $0x98] sm:$0xff]
  %v199 = vld [vmem:[%s1 + $0xa0] sm:$0xff]
  %v200 = vld [vmem:[%s1 + $0xa8] sm:$0xff]
  %v201 = vld [vmem:[%s1 + $0xb0] sm:$0xff]
  %v202 = vld [vmem:[%s1 + $0xb8] sm:$0xff]
  %v203 = vld [vmem:[%s1 + $0xc0] sm:$0xff]
  %v204 = vld [vmem:[%s1 + $0xc8] sm:$0xff]
  %v205 = vld [vmem:[%s1 + $0xd0] sm:$0xff]
  %v206 = vld [vmem:[%s1 + $0xd8] sm:$0xff]
  %v207 = vld [vmem:[%s1 + $0xe0] sm:$0xff]
  %v208 = vld [vmem:[%s1 + $0xe8] sm:$0xff]
  %v209 = vld [vmem:[%s1 + $0xf0] sm:$0xff]
  %v210 = vld [vmem:[%s1 + $0xf8] sm:$0xff]
  %v211 = vld [vmem:[%s1 + $0x100] sm:$0xff]
  %v212 = vld [vmem:[%s1 + $0x108] sm:$0xff]
  %v213 = vld [vmem:[%s1 + $0x110] sm:$0xff]
  %v214 = vld [vmem:[%s1 + $0x118] sm:$0xff]
  %v215 = vld [vmem:[%s1 + $0x120] sm:$0xff]
  %v216 = vld [vmem:[%s1 + $0x128] sm:$0xff]
  %v217 = vld [vmem:[%s1 + $0x130] sm:$0xff]
  %v218 = vld [vmem:[%s1 + $0x138] sm:$0xff]
  %v219 = vld [vmem:[%s1 + $0x140] sm:$0xff]
  %v220 = vld [vmem:[%s1 + $0x148] sm:$0xff]
  %v221 = vld [vmem:[%s1 + $0x150] sm:$0xff]
  %v222 = vld [vmem:[%s1 + $0x158] sm:$0xff]
  %v223 = vld [vmem:[%s1 + $0x160] sm:$0xff]
  %v224 = vld [vmem:[%s1 + $0x168] sm:$0xff]
  %v225 = vld [vmem:[%s1 + $0x170] sm:$0xff]
  %v226 = vld [vmem:[%s1 + $0x178] sm:$0xff]
  %v227 = vld [vmem:[%s1 + $0x180] sm:$0xff]
  %v228 = vld [vmem:[%s1 + $0x188] sm:$0xff]
  %v229 = vld [vmem:[%s1 + $0x190] sm:$0xff]
  %v230 = vld [vmem:[%s1 + $0x198] sm:$0xff]
  %v231 = vld [vmem:[%s1 + $0x1a0] sm:$0xff]
  %v232 = vld [vmem:[%s1 + $0x1a8] sm:$0xff]
  %v233 = vld [vmem:[%s1 + $0x1b0] sm:$0xff]
  %v234 = vld [vmem:[%s1 + $0x1b8] sm:$0xff]
  %v235 = vld [vmem:[%s1 + $0x1c0] sm:$0xff]
  %v236 = vld [vmem:[%s1 + $0x1c8] sm:$0xff]
  %v237 = vld [vmem:[%s1 + $0x1d0] sm:$0xff]
  %v238 = vld [vmem:[%s1 + $0x1d8] sm:$0xff]
  %v239 = vld [vmem:[%s1 + $0x1e0] sm:$0xff]
  %v240 = vld [vmem:[%s1 + $0x1e8] sm:$0xff]
  %v241 = vld [vmem:[%s1 + $0x1f0] sm:$0xff]
  %v242 = vld [vmem:[%s1 + $0x1f8] sm:$0xff]
  %v243 = vld [vmem:[%s1 + $0x200] sm:$0xff]
  %v244 = vld [vmem:[%s1 + $0x208] sm:$0xff]
  %v245 = vld [vmem:[%s1 + $0x210] sm:$0xff]
  %v246 = vld [vmem:[%s1 + $0x218] sm:$0xff]
  %v247 = vld [vmem:[%s1 + $0x220] sm:$0xff]
  %v248 = vld [vmem:[%s1 + $0x228] sm:$0xff]
  %v249 = vld [vmem:[%s1 + $0x230] sm:$0xff]
  %v250 = vld [vmem:[%s1 + $0x238] sm:$0xff]
  %v251 = vld [vmem:[%s3] sm:$0xff]
  %v252 = vld [vmem:[%s3 + $0x8] sm:$0xff]
  %v253 = vld [vmem:[%s3 + $0x10] sm:$0xff]
  %v254 = vld [vmem:[%s3 + $0x18] sm:$0xff]
  %v255 = vld [vmem:[%s3 + $0x20] sm:$0xff]
  %v256 = vld [vmem:[%s3 + $0x28] sm:$0xff]
  %v257 = vld [vmem:[%s3 + $0x30] sm:$0xff]
  %v258 = vld [vmem:[%s3 + $0x38] sm:$0xff]
  %v259 = vld [vmem:[%s3 + $0x40] sm:$0xff]
  %v260 = vld [vmem:[%s3 + $0x48] sm:$0xff]
  %v261 = vld [vmem:[%s3 + $0x50] sm:$0xff]
  %v262 = vld [vmem:[%s3 + $0x58] sm:$0xff]
  %v263 = vld [vmem:[%s3 + $0x60] sm:$0xff]
  %v264 = vld [vmem:[%s3 + $0x68] sm:$0xff]
  %v265 = vld [vmem:[%s3 + $0x70] sm:$0xff]
  %v266 = vld [vmem:[%s3 + $0x78] sm:$0xff]
  %v267 = vld [vmem:[%s3 + $0x80] sm:$0xff]
  %v268 = vld [vmem:[%s3 + $0x88] sm:$0xff]
  %v269 = vld [vmem:[%s3 + $0x90] sm:$0xff]
  %v270 = vld [vmem:[%s3 + $0x98] sm:$0xff]
  %v271 = vld [vmem:[%s3 + $0xa0] sm:$0xff]
  %v272 = vld [vmem:[%s3 + $0xa8] sm:$0xff]
  %v273 = vld [vmem:[%s3 + $0xb0] sm:$0xff]
  %v274 = vld [vmem:[%s3 + $0xb8] sm:$0xff]
  %v275 = vld [vmem:[%s3 + $0xc0] sm:$0xff]
  %v276 = vld [vmem:[%s3 + $0xc8] sm:$0xff]
  %v277 = vld [vmem:[%s3 + $0xd0] sm:$0xff]
  %v278 = vld [vmem:[%s3 + $0xd8] sm:$0xff]
  %v279 = vld [vmem:[%s3 + $0xe0] sm:$0xff]
  %v280 = vld [vmem:[%s3 + $0xe8] sm:$0xff]
  %v281 = vld [vmem:[%s3 + $0xf0] sm:$0xff]
  %v282 = vld [vmem:[%s3 + $0xf8] sm:$0xff]
  %v283 = vld [vmem:[%s3 + $0x100] sm:$0xff]
  %v284 = vld [vmem:[%s3 + $0x108] sm:$0xff]
  %v285 = vld [vmem:[%s3 + $0x110] sm:$0xff]
  %v286 = vld [vmem:[%s3 + $0x118] sm:$0xff]
  %v287 = vld [vmem:[%s3 + $0x120] sm:$0xff]
  %v288 = vld [vmem:[%s3 + $0x128] sm:$0xff]
  %v289 = vld [vmem:[%s3 + $0x130] sm:$0xff]
  %v290 = vld [vmem:[%s3 + $0x138] sm:$0xff]
  %v291 = vld [vmem:[%s3 + $0x140] sm:$0xff]
  %v292 = vld [vmem:[%s3 + $0x148] sm:$0xff]
  %v293 = vld [vmem:[%s3 + $0x150] sm:$0xff]
  %v294 = vld [vmem:[%s3 + $0x158] sm:$0xff]
  %v295 = vld [vmem:[%s3 + $0x160] sm:$0xff]
  %v296 = vld [vmem:[%s3 + $0x168] sm:$0xff]
  %v297 = vld [vmem:[%s3 + $0x170] sm:$0xff]
  %v298 = vld [vmem:[%s3 + $0x178] sm:$0xff]
  %v299 = vld [vmem:[%s3 + $0x180] sm:$0xff]
  %v300 = vld [vmem:[%s3 + $0x188] sm:$0xff]
  %v301 = vld [vmem:[%s3 + $0x190] sm:$0xff]
  %v302 = vld [vmem:[%s3 + $0x198] sm:$0xff]
  %v303 = vld [vmem:[%s3 + $0x1a0] sm:$0xff]
  %v304 = vld [vmem:[%s3 + $0x1a8] sm:$0xff]
  %v305 = vld [vmem:[%s3 + $0x1b0] sm:$0xff]
  %v306 = vld [vmem:[%s3 + $0x1b8] sm:$0xff]
  %v307 = vld [vmem:[%s3 + $0x1c0] sm:$0xff]
  %v308 = vld [vmem:[%s3 + $0x1c8] sm:$0xff]
  %v309 = vld [vmem:[%s3 + $0x1d0] sm:$0xff]
  %v310 = vld [vmem:[%s3 + $0x1d8] sm:$0xff]
  %v311 = vld [vmem:[%s3 + $0x1e0] sm:$0xff]
  %v312 = vld [vmem:[%s3 + $0x1e8] sm:$0xff]
  %v313 = vld [vmem:[%s3 + $0x1f0] sm:$0xff]
  %v314 = vld [vmem:[%s3 + $0x1f8] sm:$0xff]
  %v315 = vld [vmem:[%s3 + $0x200] sm:$0xff]
  %v316 = vld [vmem:[%s3 + $0x208] sm:$0xff]
  %v317 = vld [vmem:[%s3 + $0x210] sm:$0xff]
  %v318 = vld [vmem:[%s3 + $0x218] sm:$0xff]
  %v319 = vld [vmem:[%s3 + $0x220] sm:$0xff]
  %v320 = vld [vmem:[%s3 + $0x228] sm:$0xff]
  %v321 = vld [vmem:[%s3 + $0x230] sm:$0xff]
  %v322 = vld [vmem:[%s3 + $0x238] sm:$0xff]
  %v323 = vld [vmem:[%s3 + $0x240] sm:$0xff]
  %v324 = vld [vmem:[%s3 + $0x248] sm:$0xff]
  %v325 = vld [vmem:[%s3 + $0x250] sm:$0xff]
  %v326 = vld [vmem:[%s3 + $0x258] sm:$0xff]
  %v327 = vld [vmem:[%s3 + $0x260] sm:$0xff]
  %v328 = vld [vmem:[%s3 + $0x268] sm:$0xff]
  %v329 = vld [vmem:[%s3 + $0x270] sm:$0xff]
  %v330 = vld [vmem:[%s3 + $0x278] sm:$0xff]
  %v331 = vld [vmem:[%s3 + $0x280] sm:$0xff]
  %v332 = vld [vmem:[%s3 + $0x288] sm:$0xff]
  %v333 = vld [vmem:[%s3 + $0x290] sm:$0xff]
  %v334 = vld [vmem:[%s3 + $0x298] sm:$0xff]
  %v335 = vld [vmem:[%s3 + $0x2a0] sm:$0xff]
  %v336 = vld [vmem:[%s3 + $0x2a8] sm:$0xff]
  %v337 = vld [vmem:[%s3 + $0x2b0] sm:$0xff]
  %v338 = vld [vmem:[%s3 + $0x2b8] sm:$0xff]
  %v339 = vld [vmem:[%s3 + $0x2c0] sm:$0xff]
  %v340 = vld [vmem:[%s3 + $0x2c8] sm:$0xff]
  %v341 = vld [vmem:[%s3 + $0x2d0] sm:$0xff]
  %v342 = vld [vmem:[%s3 + $0x2d8] sm:$0xff]
  %v343 = vld [vmem:[%s3 + $0x2e0] sm:$0xff]
  %v344 = vld [vmem:[%s3 + $0x2e8] sm:$0xff]
  %v345 = vld [vmem:[%s3 + $0x2f0] sm:$0xff]
  %v346 = vld [vmem:[%s3 + $0x2f8] sm:$0xff]
  %v347 = vld [vmem:[%s3 + $0x300] sm:$0xff]
  %v348 = vld [vmem:[%s3 + $0x308] sm:$0xff]
  %v349 = vld [vmem:[%s3 + $0x310] sm:$0xff]
  %v350 = vld [vmem:[%s3 + $0x318] sm:$0xff]
  %v351 = vld [vmem:[%s3 + $0x320] sm:$0xff]
  %v352 = vld [vmem:[%s3 + $0x328] sm:$0xff]
  %v353 = vld [vmem:[%s3 + $0x330] sm:$0xff]
  %v354 = vld [vmem:[%s3 + $0x338] sm:$0xff]
  %v355 = vld [vmem:[%s3 + $0x340] sm:$0xff]
  %v356 = vld [vmem:[%s3 + $0x348] sm:$0xff]
  %v357 = vld [vmem:[%s3 + $0x350] sm:$0xff]
  %v358 = vld [vmem:[%s3 + $0x358] sm:$0xff]
  %v359 = vld [vmem:[%s3 + $0x360] sm:$0xff]
  %v360 = vld [vmem:[%s3 + $0x368] sm:$0xff]
  %v361 = vld [vmem:[%s3 + $0x370] sm:$0xff]
  %v362 = vld [vmem:[%s3 + $0x378] sm:$0xff]
  %v363 = vld [vmem:[%s3 + $0x380] sm:$0xff]
  %v364 = vld [vmem:[%s3 + $0x388] sm:$0xff]
  %v365 = vld [vmem:[%s3 + $0x390] sm:$0xff]
  %v366 = vld [vmem:[%s3 + $0x398] sm:$0xff]
  %v367 = vld [vmem:[%s3 + $0x3a0] sm:$0xff]
  %v368 = vld [vmem:[%s3 + $0x3a8] sm:$0xff]
  %v369 = vld [vmem:[%s3 + $0x3b0] sm:$0xff]
  %v370 = vld [vmem:[%s3 + $0x3b8] sm:$0xff]
  %v371 = vld [vmem:[%s3 + $0x3c0] sm:$0xff]
  %v372 = vld [vmem:[%s3 + $0x3c8] sm:$0xff]
  %v373 = vld [vmem:[%s3 + $0x3d0] sm:$0xff]
  %v374 = vld [vmem:[%s3 + $0x3d8] sm:$0xff]
  %v375 = vld [vmem:[%s3 + $0x3e0] sm:$0xff]
  %v376 = vld [vmem:[%s3 + $0x3e8] sm:$0xff]
  %v377 = vld [vmem:[%s3 + $0x3f0] sm:$0xff]
  %v378 = vld [vmem:[%s3 + $0x3f8] sm:$0xff]
  %v379 = vld [vmem:[%s3 + $0x400] sm:$0xff]
  %v380 = vld [vmem:[%s3 + $0x408] sm:$0xff]
  %v381 = vld [vmem:[%s3 + $0x410] sm:$0xff]
  %v382 = vld [vmem:[%s3 + $0x418] sm:$0xff]
  %v383 = vld [vmem:[%s3 + $0x420] sm:$0xff]
  %v384 = vld [vmem:[%s3 + $0x428] sm:$0xff]
  %v385 = vld [vmem:[%s3 + $0x430] sm:$0xff]
  %v386 = vld [vmem:[%s3 + $0x438] sm:$0xff]
  %v387 = vld [vmem:[%s3 + $0x440] sm:$0xff]
  %v388 = vld [vmem:[%s3 + $0x448] sm:$0xff]
  %v389 = vld [vmem:[%s3 + $0x450] sm:$0xff]
  %v390 = vld [vmem:[%s3 + $0x458] sm:$0xff]
  %v391 = vld [vmem:[%s3 + $0x460] sm:$0xff]
  %v392 = vld [vmem:[%s3 + $0x468] sm:$0xff]
  %v393 = vld [vmem:[%s3 + $0x470] sm:$0xff]
  %v394 = vld [vmem:[%s3 + $0x478] sm:$0xff]
  %v395 = vld [vmem:[%s3 + $0x480] sm:$0xff]
  %v396 = vld [vmem:[%s3 + $0x488] sm:$0xff]
  %v397 = vld [vmem:[%s3 + $0x490] sm:$0xff]
  %v398 = vld [vmem:[%s3 + $0x498] sm:$0xff]
  %v399 = vld [vmem:[%s3 + $0x4a0] sm:$0xff]
  %v400 = vld [vmem:[%s3 + $0x4a8] sm:$0xff]
  %v401 = vld [vmem:[%s3 + $0x4b0] sm:$0xff]
  %v402 = vld [vmem:[%s3 + $0x4b8] sm:$0xff]
  %v403 = vld [vmem:[%s3 + $0x4c0] sm:$0xff]
  %v404 = vld [vmem:[%s3 + $0x4c8] sm:$0xff]
  %v405 = vld [vmem:[%s3 + $0x4d0] sm:$0xff]
  %v406 = vld [vmem:[%s3 + $0x4d8] sm:$0xff]
  %v407 = vld [vmem:[%s3 + $0x4e0] sm:$0xff]
  %v408 = vld [vmem:[%s3 + $0x4e8] sm:$0xff]
  %v409 = vld [vmem:[%s3 + $0x4f0] sm:$0xff]
  %v410 = vld [vmem:[%s3 + $0x4f8] sm:$0xff]
  %v411 = vld [vmem:[%s3 + $0x500] sm:$0xff]
  %v412 = vld [vmem:[%s3 + $0x508] sm:$0xff]
  %v413 = vld [vmem:[%s3 + $0x510] sm:$0xff]
  %v414 = vld [vmem:[%s3 + $0x518] sm:$0xff]
  %v415 = vld [vmem:[%s3 + $0x520] sm:$0xff]
  %v416 = vld [vmem:[%s3 + $0x528] sm:$0xff]
  %v417 = vld [vmem:[%s3 + $0x530] sm:$0xff]
  %v418 = vld [vmem:[%s3 + $0x538] sm:$0xff]
  %v419 = vld [vmem:[%s3 + $0x540] sm:$0xff]
  %v420 = vld [vmem:[%s3 + $0x548] sm:$0xff]
  %v421 = vld [vmem:[%s3 + $0x550] sm:$0xff]
  %v422 = vld [vmem:[%s3 + $0x558] sm:$0xff]
  %v423 = vld [vmem:[%s3 + $0x560] sm:$0xff]
  %v424 = vld [vmem:[%s3 + $0x568] sm:$0xff]
  %v425 = vld [vmem:[%s3 + $0x570] sm:$0xff]
  %v426 = vld [vmem:[%s3 + $0x578] sm:$0xff]
  %v427 = vld [vmem:[%s3 + $0x580] sm:$0xff]
  %v428 = vld [vmem:[%s3 + $0x588] sm:$0xff]
  %v429 = vld [vmem:[%s3 + $0x590] sm:$0xff]
  %v430 = vld [vmem:[%s3 + $0x598] sm:$0xff]
  %v431 = vld [vmem:[%s3 + $0x5a0] sm:$0xff]
  %v432 = vld [vmem:[%s3 + $0x5a8] sm:$0xff]
  %v433 = vld [vmem:[%s3 + $0x5b0] sm:$0xff]
  %v434 = vld [vmem:[%s3 + $0x5b8] sm:$0xff]
  %v435 = vld [vmem:[%s3 + $0x5c0] sm:$0xff]
  %v436 = vld [vmem:[%s3 + $0x5c8] sm:$0xff]
  %v437 = vld [vmem:[%s3 + $0x5d0] sm:$0xff]
  %v438 = vld [vmem:[%s3 + $0x5d8] sm:$0xff]
  %v439 = vld [vmem:[%s3 + $0x5e0] sm:$0xff]
  %v440 = vld [vmem:[%s3 + $0x5e8] sm:$0xff]
  %v441 = vld [vmem:[%s3 + $0x5f0] sm:$0xff]
  %v442 = vld [vmem:[%s3 + $0x5f8] sm:$0xff]
  %v443 = vld [vmem:[%s3 + $0x600] sm:$0xff]
  %v444 = vld [vmem:[%s3 + $0x608] sm:$0xff]
  %v445 = vld [vmem:[%s3 + $0x610] sm:$0xff]
  %v446 = vld [vmem:[%s3 + $0x618] sm:$0xff]
  %v447 = vld [vmem:[%s3 + $0x620] sm:$0xff]
  %v448 = vld [vmem:[%s3 + $0x628] sm:$0xff]
  %v449 = vld [vmem:[%s3 + $0x630] sm:$0xff]
  %v450 = vld [vmem:[%s3 + $0x638] sm:$0xff]
  %v451 = vld [vmem:[%s3 + $0x640] sm:$0xff]
  %v452 = vld [vmem:[%s3 + $0x648] sm:$0xff]
  %v453 = vld [vmem:[%s3 + $0x650] sm:$0xff]
  %v454 = vld [vmem:[%s3 + $0x658] sm:$0xff]
  %v455 = vld [vmem:[%s3 + $0x660] sm:$0xff]
  %v456 = vld [vmem:[%s3 + $0x668] sm:$0xff]
  %v457 = vld [vmem:[%s3 + $0x670] sm:$0xff]
  %v458 = vld [vmem:[%s3 + $0x678] sm:$0xff]
  %v459 = vld [vmem:[%s3 + $0x680] sm:$0xff]
  %v460 = vld [vmem:[%s3 + $0x688] sm:$0xff]
  %v461 = vld [vmem:[%s3 + $0x690] sm:$0xff]
  %v462 = vld [vmem:[%s3 + $0x698] sm:$0xff]
  %v463 = vld [vmem:[%s3 + $0x6a0] sm:$0xff]
  %v464 = vld [vmem:[%s3 + $0x6a8] sm:$0xff]
  %v465 = vld [vmem:[%s3 + $0x6b0] sm:$0xff]
  %v466 = vld [vmem:[%s3 + $0x6b8] sm:$0xff]
  %v467 = vld [vmem:[%s3 + $0x6c0] sm:$0xff]
  %v468 = vld [vmem:[%s3 + $0x6c8] sm:$0xff]
  %v469 = vld [vmem:[%s3 + $0x6d0] sm:$0xff]
  %v470 = vld [vmem:[%s3 + $0x6d8] sm:$0xff]
  %v471 = vld [vmem:[%s3 + $0x6e0] sm:$0xff]
  %v472 = vld [vmem:[%s3 + $0x6e8] sm:$0xff]
  %v473 = vld [vmem:[%s3 + $0x6f0] sm:$0xff]
  %v474 = vld [vmem:[%s3 + $0x6f8] sm:$0xff]
  %v475 = vld [vmem:[%s3 + $0x700] sm:$0xff]
  %v476 = vld [vmem:[%s3 + $0x708] sm:$0xff]
  %v477 = vld [vmem:[%s3 + $0x710] sm:$0xff]
  %v478 = vld [vmem:[%s3 + $0x718] sm:$0xff]
  %v479 = vld [vmem:[%s3 + $0x720] sm:$0xff]
  %v480 = vld [vmem:[%s3 + $0x728] sm:$0xff]
  %v481 = vld [vmem:[%s3 + $0x730] sm:$0xff]
  %v482 = vld [vmem:[%s3 + $0x738] sm:$0xff]
  %v483 = vld [vmem:[%s3 + $0x740] sm:$0xff]
  %v484 = vld [vmem:[%s3 + $0x748] sm:$0xff]
  %v485 = vld [vmem:[%s3 + $0x750] sm:$0xff]
  %v486 = vld [vmem:[%s3 + $0x758] sm:$0xff]
  %v487 = vld [vmem:[%s3 + $0x760] sm:$0xff]
  %v488 = vld [vmem:[%s3 + $0x768] sm:$0xff]
  %v489 = vld [vmem:[%s3 + $0x770] sm:$0xff]
  %v490 = vld [vmem:[%s3 + $0x778] sm:$0xff]
  %v491 = vld [vmem:[%s3 + $0x780] sm:$0xff]
  %v492 = vld [vmem:[%s3 + $0x788] sm:$0xff]
  %v493 = vld [vmem:[%s3 + $0x790] sm:$0xff]
  %v494 = vld [vmem:[%s3 + $0x798] sm:$0xff]
  %v495 = vld [vmem:[%s3 + $0x7a0] sm:$0xff]
  %v496 = vld [vmem:[%s3 + $0x7a8] sm:$0xff]
  %v497 = vld [vmem:[%s3 + $0x7b0] sm:$0xff]
  %v498 = vld [vmem:[%s3 + $0x7b8] sm:$0xff]
  %v499 = vld [vmem:[%s3 + $0x7c0] sm:$0xff]
  %v500 = vld [vmem:[%s3 + $0x7c8] sm:$0xff]
  %v501 = vld [vmem:[%s3 + $0x7d0] sm:$0xff]
  %v502 = vld [vmem:[%s3 + $0x7d8] sm:$0xff]
  %v503 = vld [vmem:[%s3 + $0x7e0] sm:$0xff]
  %v504 = vld [vmem:[%s3 + $0x7e8] sm:$0xff]
  %v505 = vld [vmem:[%s3 + $0x7f0] sm:$0xff]
  %v506 = vld [vmem:[%s3 + $0x7f8] sm:$0xff]
  %v507 = vld [vmem:[%s3 + $0x800] sm:$0xff]
  %v508 = vld [vmem:[%s3 + $0x808] sm:$0xff]
  %v509 = vld [vmem:[%s3 + $0x810] sm:$0xff]
  %v510 = vld [vmem:[%s3 + $0x818] sm:$0xff]
  %v511 = vld [vmem:[%s3 + $0x820] sm:$0xff]
  %v512 = vld [vmem:[%s3 + $0x828] sm:$0xff]
  %v513 = vld [vmem:[%s3 + $0x830] sm:$0xff]
  %v514 = vld [vmem:[%s3 + $0x838] sm:$0xff]
  %v515 = vld [vmem:[%s3 + $0x840] sm:$0xff]
  %v516 = vld [vmem:[%s3 + $0x848] sm:$0xff]
  %v517 = vld [vmem:[%s3 + $0x850] sm:$0xff]
  %v518 = vld [vmem:[%s3 + $0x858] sm:$0xff]
  %v519 = vld [vmem:[%s3 + $0x860] sm:$0xff]
  %v520 = vld [vmem:[%s3 + $0x868] sm:$0xff]
  %v521 = vld [vmem:[%s3 + $0x870] sm:$0xff]
  %v522 = vld [vmem:[%s3 + $0x878] sm:$0xff]
  %v523 = vld [vmem:[%s3 + $0x880] sm:$0xff]
  %v524 = vld [vmem:[%s3 + $0x888] sm:$0xff]
  %v525 = vld [vmem:[%s3 + $0x890] sm:$0xff]
  %v526 = vld [vmem:[%s3 + $0x898] sm:$0xff]
  %v527 = vld [vmem:[%s3 + $0x8a0] sm:$0xff]
  %v528 = vld [vmem:[%s3 + $0x8a8] sm:$0xff]
  %v529 = vld [vmem:[%s3 + $0x8b0] sm:$0xff]
  %v530 = vld [vmem:[%s3 + $0x8b8] sm:$0xff]
  %v531 = vld [vmem:[%s3 + $0x8c0] sm:$0xff]
  %v532 = vld [vmem:[%s3 + $0x8c8] sm:$0xff]
  %v533 = vld [vmem:[%s3 + $0x8d0] sm:$0xff]
  %v534 = vld [vmem:[%s3 + $0x8d8] sm:$0xff]
  %v535 = vld [vmem:[%s3 + $0x8e0] sm:$0xff]
  %v536 = vld [vmem:[%s3 + $0x8e8] sm:$0xff]
  %v537 = vld [vmem:[%s3 + $0x8f0] sm:$0xff]
  %v538 = vld [vmem:[%s3 + $0x8f8] sm:$0xff]
  %539 = vmatprep.subr.mxu0 0.0
  %540 = vmatpush1.msra.mxu0 %v251
  %541 = vmatprep.subr.mxu0 0.0
  %542 = vmatpush1.msra.mxu0 %v252
  %543 = vmatprep.subr.mxu0 0.0
  %544 = vmatpush1.msra.mxu0 %v253
  %545 = vmatprep.subr.mxu0 0.0
  %546 = vmatpush1.msra.mxu0 %v254
  %547 = vmatprep.subr.mxu0 0.0
  %548 = vmatpush1.msra.mxu0 %v255
  %549 = vmatprep.subr.mxu0 0.0
  %550 = vmatpush1.msra.mxu0 %v256
  %551 = vmatprep.subr.mxu0 0.0
  %552 = vmatpush1.msra.mxu0 %v257
  %553 = vmatprep.subr.mxu0 0.0
  %554 = vmatpush1.msra.mxu0 %v258
  %555 = vmatprep.subr.mxu0 0.0
  %556 = vmatpush1.msra.mxu0 %v259
  %557 = vmatprep.subr.mxu0 0.0
  %558 = vmatpush1.msra.mxu0 %v260
  %559 = vmatprep.subr.mxu0 0.0
  %560 = vmatpush1.msra.mxu0 %v261
  %561 = vmatprep.subr.mxu0 0.0
  %562 = vmatpush1.msra.mxu0 %v262
  %563 = vmatprep.subr.mxu0 0.0
  %564 = vmatpush1.msra.mxu0 %v263
  %565 = vmatprep.subr.mxu0 0.0
  %566 = vmatpush1.msra.mxu0 %v264
  %567 = vmatprep.subr.mxu0 0.0
  %568 = vmatpush1.msra.mxu0 %v265
  %569 = vmatprep.subr.mxu0 0.0
  %570 = vmatpush1.msra.mxu0 %v266
  %571 = vmatprep.subr.mxu0 0.0
  %572 = vmatpush1.msra.mxu0 %v267
  %573 = vmatprep.subr.mxu0 0.0
  %574 = vmatpush1.msra.mxu0 %v268
  %575 = vmatprep.subr.mxu0 0.0
  %576 = vmatpush1.msra.mxu0 %v269
  %577 = vmatprep.subr.mxu0 0.0
  %578 = vmatpush1.msra.mxu0 %v270
  %579 = vmatprep.subr.mxu0 0.0
  %580 = vmatpush1.msra.mxu0 %v271
  %581 = vmatprep.subr.mxu0 0.0
  %582 = vmatpush1.msra.mxu0 %v272
  %583 = vmatprep.subr.mxu0 0.0
  %584 = vmatpush1.msra.mxu0 %v273
  %585 = vmatprep.subr.mxu0 0.0
  %586 = vmatpush1.msra.mxu0 %v274
  %587 = vmatprep.subr.mxu0 0.0
  %588 = vmatpush1.msra.mxu0 %v275
  %589 = vmatprep.subr.mxu0 0.0
  %590 = vmatpush1.msra.mxu0 %v276
  %591 = vmatprep.subr.mxu0 0.0
  %592 = vmatpush1.msra.mxu0 %v277
  %593 = vmatprep.subr.mxu0 0.0
  %594 = vmatpush1.msra.mxu0 %v278
  %595 = vmatprep.subr.mxu0 0.0
  %596 = vmatpush1.msra.mxu0 %v279
  %597 = vmatprep.subr.mxu0 0.0
  %598 = vmatpush1.msra.mxu0 %v280
  %599 = vmatprep.subr.mxu0 0.0
  %600 = vmatpush1.msra.mxu0 %v281
  %601 = vmatprep.subr.mxu0 0.0
  %602 = vmatpush1.msra.mxu0 %v282
  %603 = vmatprep.mubr.f32.mxu0 %v180
  %604 = vmatmul.mubr.f32.gmra.mrb[0].mxu0 %v179
  %v605 = vpop.f32.mrb[0].mxu0
  %v606 = vadd.f32 0.0, %v605
  %v607 = vpop.f32.mrb[0].mxu0
  %608 = vmatprep.mubr.f32.mxu0 %v198
  %609 = vmatmul.mubr.f32.gmra.mrb[0].mxu0 %v197
  %v610 = vpop.f32.mrb[0].mxu0
  %v611 = vadd.f32 0.0, %v610
  %v612 = vpop.f32.mrb[0].mxu0
  %613 = vmatprep.mubr.f32.mxu0 %v216
  %614 = vmatmul.mubr.f32.gmra.mrb[0].mxu0 %v215
  %v615 = vpop.f32.mrb[0].mxu0
  %v616 = vadd.f32 0.0, %v615
  %v617 = vpop.f32.mrb[0].mxu0
  %618 = vmatprep.mubr.f32.mxu0 %v234
  %619 = vmatmul.mubr.f32.gmra.mrb[0].mxu0 %v233
  %v620 = vpop.f32.mrb[0].mxu0
  %v621 = vadd.f32 0.0, %v620
  %v622 = vpop.f32.mrb[0].mxu0
  %623 = vdwg.mxu0
  %624 = vmatprep.subr.mxu0 0.0
  %625 = vmatpush1.msra.mxu0 %v283
  %626 = vmatprep.subr.mxu0 0.0
  %627 = vmatpush1.msra.mxu0 %v284
  %628 = vmatprep.subr.mxu0 0.0
  %629 = vmatpush1.msra.mxu0 %v285
  %630 = vmatprep.subr.mxu0 0.0
  %631 = vmatpush1.msra.mxu0 %v286
  %632 = vmatprep.subr.mxu0 0.0
  %633 = vmatpush1.msra.mxu0 %v287
  %634 = vmatprep.subr.mxu0 0.0
  %635 = vmatpush1.msra.mxu0 %v288
  %636 = vmatprep.subr.mxu0 0.0
  %637 = vmatpush1.msra.mxu0 %v289
  %638 = vmatprep.subr.mxu0 0.0
  %639 = vmatpush1.msra.mxu0 %v290
  %640 = vmatprep.subr.mxu0 0.0
  %641 = vmatpush1.msra.mxu0 %v291
  %642 = vmatprep.subr.mxu0 0.0
  %643 = vmatpush1.msra.mxu0 %v292
  %644 = vmatprep.subr.mxu0 0.0
  %645 = vmatpush1.msra.mxu0 %v293
  %646 = vmatprep.subr.mxu0 0.0
  %647 = vmatpush1.msra.mxu0 %v294
  %648 = vmatprep.subr.mxu0 0.0
  %649 = vmatpush1.msra.mxu0 %v295
  %650 = vmatprep.subr.mxu0 0.0
  %651 = vmatpush1.msra.mxu0 %v296
  %652 = vmatprep.subr.mxu0 0.0
  %653 = vmatpush1.msra.mxu0 %v297
  %654 = vmatprep.subr.mxu0 0.0
  %655 = vmatpush1.msra.mxu0 %v298
  %656 = vmatprep.subr.mxu0 0.0
  %657 = vmatpush1.msra.mxu0 %v299
  %658 = vmatprep.subr.mxu0 0.0
  %659 = vmatpush1.msra.mxu0 %v300
  %660 = vmatprep.subr.mxu0 0.0
  %661 = vmatpush1.msra.mxu0 %v301
  %662 = vmatprep.subr.mxu0 0.0
  %663 = vmatpush1.msra.mxu0 %v302
  %664 = vmatprep.subr.mxu0 0.0
  %665 = vmatpush1.msra.mxu0 %v303
  %666 = vmatprep.subr.mxu0 0.0
  %667 = vmatpush1.msra.mxu0 %v304
  %668 = vmatprep.subr.mxu0 0.0
  %669 = vmatpush1.msra.mxu0 %v305
  %670 = vmatprep.subr.mxu0 0.0
  %671 = vmatpush1.msra.mxu0 %v306
  %672 = vmatprep.subr.mxu0 0.0
  %673 = vmatpush1.msra.mxu0 %v307
  %674 = vmatprep.subr.mxu0 0.0
  %675 = vmatpush1.msra.mxu0 %v308
  %676 = vmatprep.subr.mxu0 0.0
  %677 = vmatpush1.msra.mxu0 %v309
  %678 = vmatprep.subr.mxu0 0.0
  %679 = vmatpush1.msra.mxu0 %v310
  %680 = vmatprep.subr.mxu0 0.0
  %681 = vmatpush1.msra.mxu0 %v311
  %682 = vmatprep.subr.mxu0 0.0
  %683 = vmatpush1.msra.mxu0 %v312
  %684 = vmatprep.subr.mxu0 0.0
  %685 = vmatpush1.msra.mxu0 %v313
  %686 = vmatprep.subr.mxu0 0.0
  %687 = vmatpush1.msra.mxu0 %v314
  %688 = vmatprep.mubr.f32.mxu0 %v182
  %689 = vmatmul.mubr.f32.gmra.mrb[0].mxu0 %v181
  %v690 = vpop.f32.mrb[0].mxu0
  %v691 = vadd.f32 %v606, %v690
  %v692 = vpop.f32.mrb[0].mxu0
  %693 = vmatprep.mubr.f32.mxu0 %v200
  %694 = vmatmul.mubr.f32.gmra.mrb[0].mxu0 %v199
  %v695 = vpop.f32.mrb[0].mxu0
  %v696 = vadd.f32 %v611, %v695
  %v697 = vpop.f32.mrb[0].mxu0
  %698 = vmatprep.mubr.f32.mxu0 %v218
  %699 = vmatmul.mubr.f32.gmra.mrb[0].mxu0 %v217
  %v700 = vpop.f32.mrb[0].mxu0
  %v701 = vadd.f32 %v616, %v700
  %v702 = vpop.f32.mrb[0].mxu0
  %703 = vmatprep.mubr.f32.mxu0 %v236
  %704 = vmatmul.mubr.f32.gmra.mrb[0].mxu0 %v235
  %v705 = vpop.f32.mrb[0].mxu0
  %v706 = vadd.f32 %v621, %v705
  %v707 = vpop.f32.mrb[0].mxu0
  %708 = vdwg.mxu0
  %709 = vmatprep.subr.mxu0 0.0
  %710 = vmatpush1.msra.mxu0 %v315
  %711 = vmatprep.subr.mxu0 0.0
  %712 = vmatpush1.msra.mxu0 %v316
  %713 = vmatprep.subr.mxu0 0.0
  %714 = vmatpush1.msra.mxu0 %v317
  %715 = vmatprep.subr.mxu0 0.0
  %716 = vmatpush1.msra.mxu0 %v318
  %717 = vmatprep.subr.mxu0 0.0
  %718 = vmatpush1.msra.mxu0 %v319
  %719 = vmatprep.subr.mxu0 0.0
  %720 = vmatpush1.msra.mxu0 %v320
  %721 = vmatprep.subr.mxu0 0.0
  %722 = vmatpush1.msra.mxu0 %v321
  %723 = vmatprep.subr.mxu0 0.0
  %724 = vmatpush1.msra.mxu0 %v322
  %725 = vmatprep.subr.mxu0 0.0
  %726 = vmatpush1.msra.mxu0 %v323
  %727 = vmatprep.subr.mxu0 0.0
  %728 = vmatpush1.msra.mxu0 %v324
  %729 = vmatprep.subr.mxu0 0.0
  %730 = vmatpush1.msra.mxu0 %v325
  %731 = vmatprep.subr.mxu0 0.0
  %732 = vmatpush1.msra.mxu0 %v326
  %733 = vmatprep.subr.mxu0 0.0
  %734 = vmatpush1.msra.mxu0 %v327
  %735 = vmatprep.subr.mxu0 0.0
  %736 = vmatpush1.msra.mxu0 %v328
  %737 = vmatprep.subr.mxu0 0.0
  %738 = vmatpush1.msra.mxu0 %v329
  %739 = vmatprep.subr.mxu0 0.0
  %740 = vmatpush1.msra.mxu0 %v330
  %741 = vmatprep.subr.mxu0 0.0
  %742 = vmatpush1.msra.mxu0 %v331
  %743 = vmatprep.subr.mxu0 0.0
  %744 = vmatpush1.msra.mxu0 %v332
  %745 = vmatprep.subr.mxu0 0.0
  %746 = vmatpush1.msra.mxu0 %v333
  %747 = vmatprep.subr.mxu0 0.0
  %748 = vmatpush1.msra.mxu0 %v334
  %749 = vmatprep.subr.mxu0 0.0
  %750 = vmatpush1.msra.mxu0 %v335
  %751 = vmatprep.subr.mxu0 0.0
  %752 = vmatpush1.msra.mxu0 %v336
  %753 = vmatprep.subr.mxu0 0.0
  %754 = vmatpush1.msra.mxu0 %v337
  %755 = vmatprep.subr.mxu0 0.0
  %756 = vmatpush1.msra.mxu0 %v338
  %757 = vmatprep.subr.mxu0 0.0
  %758 = vmatpush1.msra.mxu0 %v339
  %759 = vmatprep.subr.mxu0 0.0
  %760 = vmatpush1.msra.mxu0 %v340
  %761 = vmatprep.subr.mxu0 0.0
  %762 = vmatpush1.msra.mxu0 %v341
  %763 = vmatprep.subr.mxu0 0.0
  %764 = vmatpush1.msra.mxu0 %v342
  %765 = vmatprep.subr.mxu0 0.0
  %766 = vmatpush1.msra.mxu0 %v343
  %767 = vmatprep.subr.mxu0 0.0
  %768 = vmatpush1.msra.mxu0 %v344
  %769 = vmatprep.subr.mxu0 0.0
  %770 = vmatpush1.msra.mxu0 %v345
  %771 = vmatprep.subr.mxu0 0.0
  %772 = vmatpush1.msra.mxu0 %v346
  %773 = vmatprep.mubr.f32.mxu0 %v184
  %774 = vmatmul.mubr.f32.gmra.mrb[0].mxu0 %v183
  %v775 = vpop.f32.mrb[0].mxu0
  %v776 = vadd.f32 %v691, %v775
  %v777 = vpop.f32.mrb[0].mxu0
  %778 = vmatprep.mubr.f32.mxu0 %v202
  %779 = vmatmul.mubr.f32.gmra.mrb[0].mxu0 %v201
  %v780 = vpop.f32.mrb[0].mxu0
  %v781 = vadd.f32 %v696, %v780
  %v782 = vpop.f32.mrb[0].mxu0
  %783 = vmatprep.mubr.f32.mxu0 %v220
  %784 = vmatmul.mubr.f32.gmra.mrb[0].mxu0 %v219
  %v785 = vpop.f32.mrb[0].mxu0
  %v786 = vadd.f32 %v701, %v785
  %v787 = vpop.f32.mrb[0].mxu0
  %788 = vmatprep.mubr.f32.mxu0 %v238
  %789 = vmatmul.mubr.f32.gmra.mrb[0].mxu0 %v237
  %v790 = vpop.f32.mrb[0].mxu0
  %v791 = vadd.f32 %v706, %v790
  %v792 = vpop.f32.mrb[0].mxu0
  %793 = vdwg.mxu0
  %794 = vmatprep.subr.mxu0 0.0
  %795 = vmatpush1.msra.mxu0 %v347
  %796 = vmatprep.subr.mxu0 0.0
  %797 = vmatpush1.msra.mxu0 %v348
  %798 = vmatprep.subr.mxu0 0.0
  %799 = vmatpush1.msra.mxu0 %v349
  %800 = vmatprep.subr.mxu0 0.0
  %801 = vmatpush1.msra.mxu0 %v350
  %802 = vmatprep.subr.mxu0 0.0
  %803 = vmatpush1.msra.mxu0 %v351
  %804 = vmatprep.subr.mxu0 0.0
  %805 = vmatpush1.msra.mxu0 %v352
  %806 = vmatprep.subr.mxu0 0.0
  %807 = vmatpush1.msra.mxu0 %v353
  %808 = vmatprep.subr.mxu0 0.0
  %809 = vmatpush1.msra.mxu0 %v354
  %810 = vmatprep.subr.mxu0 0.0
  %811 = vmatpush1.msra.mxu0 %v355
  %812 = vmatprep.subr.mxu0 0.0
  %813 = vmatpush1.msra.mxu0 %v356
  %814 = vmatprep.subr.mxu0 0.0
  %815 = vmatpush1.msra.mxu0 %v357
  %816 = vmatprep.subr.mxu0 0.0
  %817 = vmatpush1.msra.mxu0 %v358
  %818 = vmatprep.subr.mxu0 0.0
  %819 = vmatpush1.msra.mxu0 %v359
  %820 = vmatprep.subr.mxu0 0.0
  %821 = vmatpush1.msra.mxu0 %v360
  %822 = vmatprep.subr.mxu0 0.0
  %823 = vmatpush1.msra.mxu0 %v361
  %824 = vmatprep.subr.mxu0 0.0
  %825 = vmatpush1.msra.mxu0 %v362
  %826 = vmatprep.subr.mxu0 0.0
  %827 = vmatpush1.msra.mxu0 %v363
  %828 = vmatprep.subr.mxu0 0.0
  %829 = vmatpush1.msra.mxu0 %v364
  %830 = vmatprep.subr.mxu0 0.0
  %831 = vmatpush1.msra.mxu0 %v365
  %832 = vmatprep.subr.mxu0 0.0
  %833 = vmatpush1.msra.mxu0 %v366
  %834 = vmatprep.subr.mxu0 0.0
  %835 = vmatpush1.msra.mxu0 %v367
  %836 = vmatprep.subr.mxu0 0.0
  %837 = vmatpush1.msra.mxu0 %v368
  %838 = vmatprep.subr.mxu0 0.0
  %839 = vmatpush1.msra.mxu0 %v369
  %840 = vmatprep.subr.mxu0 0.0
  %841 = vmatpush1.msra.mxu0 %v370
  %842 = vmatprep.subr.mxu0 0.0
  %843 = vmatpush1.msra.mxu0 %v371
  %844 = vmatprep.subr.mxu0 0.0
  %845 = vmatpush1.msra.mxu0 %v372
  %846 = vmatprep.subr.mxu0 0.0
  %847 = vmatpush1.msra.mxu0 %v373
  %848 = vmatprep.subr.mxu0 0.0
  %849 = vmatpush1.msra.mxu0 %v374
  %850 = vmatprep.subr.mxu0 0.0
  %851 = vmatpush1.msra.mxu0 %v375
  %852 = vmatprep.subr.mxu0 0.0
  %853 = vmatpush1.msra.mxu0 %v376
  %854 = vmatprep.subr.mxu0 0.0
  %855 = vmatpush1.msra.mxu0 %v377
  %856 = vmatprep.subr.mxu0 0.0
  %857 = vmatpush1.msra.mxu0 %v378
  %858 = vmatprep.mubr.f32.mxu0 %v186
  %859 = vmatmul.mubr.f32.gmra.mrb[0].mxu0 %v185
  %v860 = vpop.f32.mrb[0].mxu0
  %v861 = vadd.f32 %v776, %v860
  %v862 = vpop.f32.mrb[0].mxu0
  %863 = vmatprep.mubr.f32.mxu0 %v204
  %864 = vmatmul.mubr.f32.gmra.mrb[0].mxu0 %v203
  %v865 = vpop.f32.mrb[0].mxu0
  %v866 = vadd.f32 %v781, %v865
  %v867 = vpop.f32.mrb[0].mxu0
  %868 = vmatprep.mubr.f32.mxu0 %v222
  %869 = vmatmul.mubr.f32.gmra.mrb[0].mxu0 %v221
  %v870 = vpop.f32.mrb[0].mxu0
  %v871 = vadd.f32 %v786, %v870
  %v872 = vpop.f32.mrb[0].mxu0
  %873 = vmatprep.mubr.f32.mxu0 %v240
  %874 = vmatmul.mubr.f32.gmra.mrb[0].mxu0 %v239
  %v875 = vpop.f32.mrb[0].mxu0
  %v876 = vadd.f32 %v791, %v875
  %v877 = vpop.f32.mrb[0].mxu0
  %878 = vdwg.mxu0
  %879 = vmatprep.subr.mxu0 0.0
  %880 = vmatpush1.msra.mxu0 %v379
  %881 = vmatprep.subr.mxu0 0.0
  %882 = vmatpush1.msra.mxu0 %v380
  %883 = vmatprep.subr.mxu0 0.0
  %884 = vmatpush1.msra.mxu0 %v381
  %885 = vmatprep.subr.mxu0 0.0
  %886 = vmatpush1.msra.mxu0 %v382
  %887 = vmatprep.subr.mxu0 0.0
  %888 = vmatpush1.msra.mxu0 %v383
  %889 = vmatprep.subr.mxu0 0.0
  %890 = vmatpush1.msra.mxu0 %v384
  %891 = vmatprep.subr.mxu0 0.0
  %892 = vmatpush1.msra.mxu0 %v385
  %893 = vmatprep.subr.mxu0 0.0
  %894 = vmatpush1.msra.mxu0 %v386
  %895 = vmatprep.subr.mxu0 0.0
  %896 = vmatpush1.msra.mxu0 %v387
  %897 = vmatprep.subr.mxu0 0.0
  %898 = vmatpush1.msra.mxu0 %v388
  %899 = vmatprep.subr.mxu0 0.0
  %900 = vmatpush1.msra.mxu0 %v389
  %901 = vmatprep.subr.mxu0 0.0
  %902 = vmatpush1.msra.mxu0 %v390
  %903 = vmatprep.subr.mxu0 0.0
  %904 = vmatpush1.msra.mxu0 %v391
  %905 = vmatprep.subr.mxu0 0.0
  %906 = vmatpush1.msra.mxu0 %v392
  %907 = vmatprep.subr.mxu0 0.0
  %908 = vmatpush1.msra.mxu0 %v393
  %909 = vmatprep.subr.mxu0 0.0
  %910 = vmatpush1.msra.mxu0 %v394
  %911 = vmatprep.subr.mxu0 0.0
  %912 = vmatpush1.msra.mxu0 %v395
  %913 = vmatprep.subr.mxu0 0.0
  %914 = vmatpush1.msra.mxu0 %v396
  %915 = vmatprep.subr.mxu0 0.0
  %916 = vmatpush1.msra.mxu0 %v397
  %917 = vmatprep.subr.mxu0 0.0
  %918 = vmatpush1.msra.mxu0 %v398
  %919 = vmatprep.subr.mxu0 0.0
  %920 = vmatpush1.msra.mxu0 %v399
  %921 = vmatprep.subr.mxu0 0.0
  %922 = vmatpush1.msra.mxu0 %v400
  %923 = vmatprep.subr.mxu0 0.0
  %924 = vmatpush1.msra.mxu0 %v401
  %925 = vmatprep.subr.mxu0 0.0
  %926 = vmatpush1.msra.mxu0 %v402
  %927 = vmatprep.subr.mxu0 0.0
  %928 = vmatpush1.msra.mxu0 %v403
  %929 = vmatprep.subr.mxu0 0.0
  %930 = vmatpush1.msra.mxu0 %v404
  %931 = vmatprep.subr.mxu0 0.0
  %932 = vmatpush1.msra.mxu0 %v405
  %933 = vmatprep.subr.mxu0 0.0
  %934 = vmatpush1.msra.mxu0 %v406
  %935 = vmatprep.subr.mxu0 0.0
  %936 = vmatpush1.msra.mxu0 %v407
  %937 = vmatprep.subr.mxu0 0.0
  %938 = vmatpush1.msra.mxu0 %v408
  %939 = vmatprep.subr.mxu0 0.0
  %940 = vmatpush1.msra.mxu0 %v409
  %941 = vmatprep.subr.mxu0 0.0
  %942 = vmatpush1.msra.mxu0 %v410
  %943 = vmatprep.mubr.f32.mxu0 %v188
  %944 = vmatmul.mubr.f32.gmra.mrb[0].mxu0 %v187
  %v945 = vpop.f32.mrb[0].mxu0
  %v946 = vadd.f32 %v861, %v945
  %v947 = vpop.f32.mrb[0].mxu0
  %948 = vmatprep.mubr.f32.mxu0 %v206
  %949 = vmatmul.mubr.f32.gmra.mrb[0].mxu0 %v205
  %v950 = vpop.f32.mrb[0].mxu0
  %v951 = vadd.f32 %v866, %v950
  %v952 = vpop.f32.mrb[0].mxu0
  %953 = vmatprep.mubr.f32.mxu0 %v224
  %954 = vmatmul.mubr.f32.gmra.mrb[0].mxu0 %v223
  %v955 = vpop.f32.mrb[0].mxu0
  %v956 = vadd.f32 %v871, %v955
  %v957 = vpop.f32.mrb[0].mxu0
  %958 = vmatprep.mubr.f32.mxu0 %v242
  %959 = vmatmul.mubr.f32.gmra.mrb[0].mxu0 %v241
  %v960 = vpop.f32.mrb[0].mxu0
  %v961 = vadd.f32 %v876, %v960
  %v962 = vpop.f32.mrb[0].mxu0
  %963 = vdwg.mxu0
  %964 = vmatprep.subr.mxu0 0.0
  %965 = vmatpush1.msra.mxu0 %v411
  %966 = vmatprep.subr.mxu0 0.0
  %967 = vmatpush1.msra.mxu0 %v412
  %968 = vmatprep.subr.mxu0 0.0
  %969 = vmatpush1.msra.mxu0 %v413
  %970 = vmatprep.subr.mxu0 0.0
  %971 = vmatpush1.msra.mxu0 %v414
  %972 = vmatprep.subr.mxu0 0.0
  %973 = vmatpush1.msra.mxu0 %v415
  %974 = vmatprep.subr.mxu0 0.0
  %975 = vmatpush1.msra.mxu0 %v416
  %976 = vmatprep.subr.mxu0 0.0
  %977 = vmatpush1.msra.mxu0 %v417
  %978 = vmatprep.subr.mxu0 0.0
  %979 = vmatpush1.msra.mxu0 %v418
  %980 = vmatprep.subr.mxu0 0.0
  %981 = vmatpush1.msra.mxu0 %v419
  %982 = vmatprep.subr.mxu0 0.0
  %983 = vmatpush1.msra.mxu0 %v420
  %984 = vmatprep.subr.mxu0 0.0
  %985 = vmatpush1.msra.mxu0 %v421
  %986 = vmatprep.subr.mxu0 0.0
  %987 = vmatpush1.msra.mxu0 %v422
  %988 = vmatprep.subr.mxu0 0.0
  %989 = vmatpush1.msra.mxu0 %v423
  %990 = vmatprep.subr.mxu0 0.0
  %991 = vmatpush1.msra.mxu0 %v424
  %992 = vmatprep.subr.mxu0 0.0
  %993 = vmatpush1.msra.mxu0 %v425
  %994 = vmatprep.subr.mxu0 0.0
  %995 = vmatpush1.msra.mxu0 %v426
  %996 = vmatprep.subr.mxu0 0.0
  %997 = vmatpush1.msra.mxu0 %v427
  %998 = vmatprep.subr.mxu0 0.0
  %999 = vmatpush1.msra.mxu0 %v428
  %1000 = vmatprep.subr.mxu0 0.0
  %1001 = vmatpush1.msra.mxu0 %v429
  %1002 = vmatprep.subr.mxu0 0.0
  %1003 = vmatpush1.msra.mxu0 %v430
  %1004 = vmatprep.subr.mxu0 0.0
  %1005 = vmatpush1.msra.mxu0 %v431
  %1006 = vmatprep.subr.mxu0 0.0
  %1007 = vmatpush1.msra.mxu0 %v432
  %1008 = vmatprep.subr.mxu0 0.0
  %1009 = vmatpush1.msra.mxu0 %v433
  %1010 = vmatprep.subr.mxu0 0.0
  %1011 = vmatpush1.msra.mxu0 %v434
  %1012 = vmatprep.subr.mxu0 0.0
  %1013 = vmatpush1.msra.mxu0 %v435
  %1014 = vmatprep.subr.mxu0 0.0
  %1015 = vmatpush1.msra.mxu0 %v436
  %1016 = vmatprep.subr.mxu0 0.0
  %1017 = vmatpush1.msra.mxu0 %v437
  %1018 = vmatprep.subr.mxu0 0.0
  %1019 = vmatpush1.msra.mxu0 %v438
  %1020 = vmatprep.subr.mxu0 0.0
  %1021 = vmatpush1.msra.mxu0 %v439
  %1022 = vmatprep.subr.mxu0 0.0
  %1023 = vmatpush1.msra.mxu0 %v440
  %1024 = vmatprep.subr.mxu0 0.0
  %1025 = vmatpush1.msra.mxu0 %v441
  %1026 = vmatprep.subr.mxu0 0.0
  %1027 = vmatpush1.msra.mxu0 %v442
  %1028 = vmatprep.mubr.f32.mxu0 %v190
  %1029 = vmatmul.mubr.f32.gmra.mrb[0].mxu0 %v189
  %v1030 = vpop.f32.mrb[0].mxu0
  %v1031 = vadd.f32 %v946, %v1030
  %v1032 = vpop.f32.mrb[0].mxu0
  %1033 = vmatprep.mubr.f32.mxu0 %v208
  %1034 = vmatmul.mubr.f32.gmra.mrb[0].mxu0 %v207
  %v1035 = vpop.f32.mrb[0].mxu0
  %v1036 = vadd.f32 %v951, %v1035
  %v1037 = vpop.f32.mrb[0].mxu0
  %1038 = vmatprep.mubr.f32.mxu0 %v226
  %1039 = vmatmul.mubr.f32.gmra.mrb[0].mxu0 %v225
  %v1040 = vpop.f32.mrb[0].mxu0
  %v1041 = vadd.f32 %v956, %v1040
  %v1042 = vpop.f32.mrb[0].mxu0
  %1043 = vmatprep.mubr.f32.mxu0 %v244
  %1044 = vmatmul.mubr.f32.gmra.mrb[0].mxu0 %v243
  %v1045 = vpop.f32.mrb[0].mxu0
  %v1046 = vadd.f32 %v961, %v1045
  %v1047 = vpop.f32.mrb[0].mxu0
  %1048 = vdwg.mxu0
  %1049 = vmatprep.subr.mxu0 0.0
  %1050 = vmatpush1.msra.mxu0 %v443
  %1051 = vmatprep.subr.mxu0 0.0
  %1052 = vmatpush1.msra.mxu0 %v444
  %1053 = vmatprep.subr.mxu0 0.0
  %1054 = vmatpush1.msra.mxu0 %v445
  %1055 = vmatprep.subr.mxu0 0.0
  %1056 = vmatpush1.msra.mxu0 %v446
  %1057 = vmatprep.subr.mxu0 0.0
  %1058 = vmatpush1.msra.mxu0 %v447
  %1059 = vmatprep.subr.mxu0 0.0
  %1060 = vmatpush1.msra.mxu0 %v448
  %1061 = vmatprep.subr.mxu0 0.0
  %1062 = vmatpush1.msra.mxu0 %v449
  %1063 = vmatprep.subr.mxu0 0.0
  %1064 = vmatpush1.msra.mxu0 %v450
  %1065 = vmatprep.subr.mxu0 0.0
  %1066 = vmatpush1.msra.mxu0 %v451
  %1067 = vmatprep.subr.mxu0 0.0
  %1068 = vmatpush1.msra.mxu0 %v452
  %1069 = vmatprep.subr.mxu0 0.0
  %1070 = vmatpush1.msra.mxu0 %v453
  %1071 = vmatprep.subr.mxu0 0.0
  %1072 = vmatpush1.msra.mxu0 %v454
  %1073 = vmatprep.subr.mxu0 0.0
  %1074 = vmatpush1.msra.mxu0 %v455
  %1075 = vmatprep.subr.mxu0 0.0
  %1076 = vmatpush1.msra.mxu0 %v456
  %1077 = vmatprep.subr.mxu0 0.0
  %1078 = vmatpush1.msra.mxu0 %v457
  %1079 = vmatprep.subr.mxu0 0.0
  %1080 = vmatpush1.msra.mxu0 %v458
  %1081 = vmatprep.subr.mxu0 0.0
  %1082 = vmatpush1.msra.mxu0 %v459
  %1083 = vmatprep.subr.mxu0 0.0
  %1084 = vmatpush1.msra.mxu0 %v460
  %1085 = vmatprep.subr.mxu0 0.0
  %1086 = vmatpush1.msra.mxu0 %v461
  %1087 = vmatprep.subr.mxu0 0.0
  %1088 = vmatpush1.msra.mxu0 %v462
  %1089 = vmatprep.subr.mxu0 0.0
  %1090 = vmatpush1.msra.mxu0 %v463
  %1091 = vmatprep.subr.mxu0 0.0
  %1092 = vmatpush1.msra.mxu0 %v464
  %1093 = vmatprep.subr.mxu0 0.0
  %1094 = vmatpush1.msra.mxu0 %v465
  %1095 = vmatprep.subr.mxu0 0.0
  %1096 = vmatpush1.msra.mxu0 %v466
  %1097 = vmatprep.subr.mxu0 0.0
  %1098 = vmatpush1.msra.mxu0 %v467
  %1099 = vmatprep.subr.mxu0 0.0
  %1100 = vmatpush1.msra.mxu0 %v468
  %1101 = vmatprep.subr.mxu0 0.0
  %1102 = vmatpush1.msra.mxu0 %v469
  %1103 = vmatprep.subr.mxu0 0.0
  %1104 = vmatpush1.msra.mxu0 %v470
  %1105 = vmatprep.subr.mxu0 0.0
  %1106 = vmatpush1.msra.mxu0 %v471
  %1107 = vmatprep.subr.mxu0 0.0
  %1108 = vmatpush1.msra.mxu0 %v472
  %1109 = vmatprep.subr.mxu0 0.0
  %1110 = vmatpush1.msra.mxu0 %v473
  %1111 = vmatprep.subr.mxu0 0.0
  %1112 = vmatpush1.msra.mxu0 %v474
  %1113 = vmatprep.mubr.f32.mxu0 %v192
  %1114 = vmatmul.mubr.f32.gmra.mrb[0].mxu0 %v191
  %v1115 = vpop.f32.mrb[0].mxu0
  %v1116 = vadd.f32 %v1031, %v1115
  %v1117 = vpop.f32.mrb[0].mxu0
  %1118 = vmatprep.mubr.f32.mxu0 %v210
  %1119 = vmatmul.mubr.f32.gmra.mrb[0].mxu0 %v209
  %v1120 = vpop.f32.mrb[0].mxu0
  %v1121 = vadd.f32 %v1036, %v1120
  %v1122 = vpop.f32.mrb[0].mxu0
  %1123 = vmatprep.mubr.f32.mxu0 %v228
  %1124 = vmatmul.mubr.f32.gmra.mrb[0].mxu0 %v227
  %v1125 = vpop.f32.mrb[0].mxu0
  %v1126 = vadd.f32 %v1041, %v1125
  %v1127 = vpop.f32.mrb[0].mxu0
  %1128 = vmatprep.mubr.f32.mxu0 %v246
  %1129 = vmatmul.mubr.f32.gmra.mrb[0].mxu0 %v245
  %v1130 = vpop.f32.mrb[0].mxu0
  %v1131 = vadd.f32 %v1046, %v1130
  %v1132 = vpop.f32.mrb[0].mxu0
  %1133 = vdwg.mxu0
  %1134 = vmatprep.subr.mxu0 0.0
  %1135 = vmatpush1.msra.mxu0 %v475
  %1136 = vmatprep.subr.mxu0 0.0
  %1137 = vmatpush1.msra.mxu0 %v476
  %1138 = vmatprep.subr.mxu0 0.0
  %1139 = vmatpush1.msra.mxu0 %v477
  %1140 = vmatprep.subr.mxu0 0.0
  %1141 = vmatpush1.msra.mxu0 %v478
  %1142 = vmatprep.subr.mxu0 0.0
  %1143 = vmatpush1.msra.mxu0 %v479
  %1144 = vmatprep.subr.mxu0 0.0
  %1145 = vmatpush1.msra.mxu0 %v480
  %1146 = vmatprep.subr.mxu0 0.0
  %1147 = vmatpush1.msra.mxu0 %v481
  %1148 = vmatprep.subr.mxu0 0.0
  %1149 = vmatpush1.msra.mxu0 %v482
  %1150 = vmatprep.subr.mxu0 0.0
  %1151 = vmatpush1.msra.mxu0 %v483
  %1152 = vmatprep.subr.mxu0 0.0
  %1153 = vmatpush1.msra.mxu0 %v484
  %1154 = vmatprep.subr.mxu0 0.0
  %1155 = vmatpush1.msra.mxu0 %v485
  %1156 = vmatprep.subr.mxu0 0.0
  %1157 = vmatpush1.msra.mxu0 %v486
  %1158 = vmatprep.subr.mxu0 0.0
  %1159 = vmatpush1.msra.mxu0 %v487
  %1160 = vmatprep.subr.mxu0 0.0
  %1161 = vmatpush1.msra.mxu0 %v488
  %1162 = vmatprep.subr.mxu0 0.0
  %1163 = vmatpush1.msra.mxu0 %v489
  %1164 = vmatprep.subr.mxu0 0.0
  %1165 = vmatpush1.msra.mxu0 %v490
  %1166 = vmatprep.subr.mxu0 0.0
  %1167 = vmatpush1.msra.mxu0 %v491
  %1168 = vmatprep.subr.mxu0 0.0
  %1169 = vmatpush1.msra.mxu0 %v492
  %1170 = vmatprep.subr.mxu0 0.0
  %1171 = vmatpush1.msra.mxu0 %v493
  %1172 = vmatprep.subr.mxu0 0.0
  %1173 = vmatpush1.msra.mxu0 %v494
  %1174 = vmatprep.subr.mxu0 0.0
  %1175 = vmatpush1.msra.mxu0 %v495
  %1176 = vmatprep.subr.mxu0 0.0
  %1177 = vmatpush1.msra.mxu0 %v496
  %1178 = vmatprep.subr.mxu0 0.0
  %1179 = vmatpush1.msra.mxu0 %v497
  %1180 = vmatprep.subr.mxu0 0.0
  %1181 = vmatpush1.msra.mxu0 %v498
  %1182 = vmatprep.subr.mxu0 0.0
  %1183 = vmatpush1.msra.mxu0 %v499
  %1184 = vmatprep.subr.mxu0 0.0
  %1185 = vmatpush1.msra.mxu0 %v500
  %1186 = vmatprep.subr.mxu0 0.0
  %1187 = vmatpush1.msra.mxu0 %v501
  %1188 = vmatprep.subr.mxu0 0.0
  %1189 = vmatpush1.msra.mxu0 %v502
  %1190 = vmatprep.subr.mxu0 0.0
  %1191 = vmatpush1.msra.mxu0 %v503
  %1192 = vmatprep.subr.mxu0 0.0
  %1193 = vmatpush1.msra.mxu0 %v504
  %1194 = vmatprep.subr.mxu0 0.0
  %1195 = vmatpush1.msra.mxu0 %v505
  %1196 = vmatprep.subr.mxu0 0.0
  %1197 = vmatpush1.msra.mxu0 %v506
  %1198 = vmatprep.mubr.f32.mxu0 %v194
  %1199 = vmatmul.mubr.f32.gmra.mrb[0].mxu0 %v193
  %v1200 = vpop.f32.mrb[0].mxu0
  %v1201 = vadd.f32 %v1116, %v1200
  %v1202 = vpop.f32.mrb[0].mxu0
  %1203 = vmatprep.mubr.f32.mxu0 %v212
  %1204 = vmatmul.mubr.f32.gmra.mrb[0].mxu0 %v211
  %v1205 = vpop.f32.mrb[0].mxu0
  %v1206 = vadd.f32 %v1121, %v1205
  %v1207 = vpop.f32.mrb[0].mxu0
  %1208 = vmatprep.mubr.f32.mxu0 %v230
  %1209 = vmatmul.mubr.f32.gmra.mrb[0].mxu0 %v229
  %v1210 = vpop.f32.mrb[0].mxu0
  %v1211 = vadd.f32 %v1126, %v1210
  %v1212 = vpop.f32.mrb[0].mxu0
  %1213 = vmatprep.mubr.f32.mxu0 %v248
  %1214 = vmatmul.mubr.f32.gmra.mrb[0].mxu0 %v247
  %v1215 = vpop.f32.mrb[0].mxu0
  %v1216 = vadd.f32 %v1131, %v1215
  %v1217 = vpop.f32.mrb[0].mxu0
  %1218 = vdwg.mxu0
  %1219 = vmatprep.subr.mxu0 0.0
  %1220 = vmatpush1.msra.mxu0 %v507
  %1221 = vmatprep.subr.mxu0 0.0
  %1222 = vmatpush1.msra.mxu0 %v508
  %1223 = vmatprep.subr.mxu0 0.0
  %1224 = vmatpush1.msra.mxu0 %v509
  %1225 = vmatprep.subr.mxu0 0.0
  %1226 = vmatpush1.msra.mxu0 %v510
  %1227 = vmatprep.subr.mxu0 0.0
  %1228 = vmatpush1.msra.mxu0 %v511
  %1229 = vmatprep.subr.mxu0 0.0
  %1230 = vmatpush1.msra.mxu0 %v512
  %1231 = vmatprep.subr.mxu0 0.0
  %1232 = vmatpush1.msra.mxu0 %v513
  %1233 = vmatprep.subr.mxu0 0.0
  %1234 = vmatpush1.msra.mxu0 %v514
  %1235 = vmatprep.subr.mxu0 0.0
  %1236 = vmatpush1.msra.mxu0 %v515
  %1237 = vmatprep.subr.mxu0 0.0
  %1238 = vmatpush1.msra.mxu0 %v516
  %1239 = vmatprep.subr.mxu0 0.0
  %1240 = vmatpush1.msra.mxu0 %v517
  %1241 = vmatprep.subr.mxu0 0.0
  %1242 = vmatpush1.msra.mxu0 %v518
  %1243 = vmatprep.subr.mxu0 0.0
  %1244 = vmatpush1.msra.mxu0 %v519
  %1245 = vmatprep.subr.mxu0 0.0
  %1246 = vmatpush1.msra.mxu0 %v520
  %1247 = vmatprep.subr.mxu0 0.0
  %1248 = vmatpush1.msra.mxu0 %v521
  %1249 = vmatprep.subr.mxu0 0.0
  %1250 = vmatpush1.msra.mxu0 %v522
  %1251 = vmatprep.subr.mxu0 0.0
  %1252 = vmatpush1.msra.mxu0 %v523
  %1253 = vmatprep.subr.mxu0 0.0
  %1254 = vmatpush1.msra.mxu0 %v524
  %1255 = vmatprep.subr.mxu0 0.0
  %1256 = vmatpush1.msra.mxu0 %v525
  %1257 = vmatprep.subr.mxu0 0.0
  %1258 = vmatpush1.msra.mxu0 %v526
  %1259 = vmatprep.subr.mxu0 0.0
  %1260 = vmatpush1.msra.mxu0 %v527
  %1261 = vmatprep.subr.mxu0 0.0
  %1262 = vmatpush1.msra.mxu0 %v528
  %1263 = vmatprep.subr.mxu0 0.0
  %1264 = vmatpush1.msra.mxu0 %v529
  %1265 = vmatprep.subr.mxu0 0.0
  %1266 = vmatpush1.msra.mxu0 %v530
  %1267 = vmatprep.subr.mxu0 0.0
  %1268 = vmatpush1.msra.mxu0 %v531
  %1269 = vmatprep.subr.mxu0 0.0
  %1270 = vmatpush1.msra.mxu0 %v532
  %1271 = vmatprep.subr.mxu0 0.0
  %1272 = vmatpush1.msra.mxu0 %v533
  %1273 = vmatprep.subr.mxu0 0.0
  %1274 = vmatpush1.msra.mxu0 %v534
  %1275 = vmatprep.subr.mxu0 0.0
  %1276 = vmatpush1.msra.mxu0 %v535
  %1277 = vmatprep.subr.mxu0 0.0
  %1278 = vmatpush1.msra.mxu0 %v536
  %1279 = vmatprep.subr.mxu0 0.0
  %1280 = vmatpush1.msra.mxu0 %v537
  %1281 = vmatprep.subr.mxu0 0.0
  %1282 = vmatpush1.msra.mxu0 %v538
  %1283 = vmatprep.mubr.f32.mxu0 %v196
  %1284 = vmatmul.mubr.f32.gmra.mrb[0].mxu0 %v195
  %v1285 = vpop.f32.mrb[0].mxu0
  %v1286 = vadd.f32 %v1201, %v1285
  %v1287 = vpop.f32.mrb[0].mxu0
  %1288 = vmatprep.mubr.f32.mxu0 %v214
  %1289 = vmatmul.mubr.f32.gmra.mrb[0].mxu0 %v213
  %v1290 = vpop.f32.mrb[0].mxu0
  %v1291 = vadd.f32 %v1206, %v1290
  %v1292 = vpop.f32.mrb[0].mxu0
  %1293 = vmatprep.mubr.f32.mxu0 %v232
  %1294 = vmatmul.mubr.f32.gmra.mrb[0].mxu0 %v231
  %v1295 = vpop.f32.mrb[0].mxu0
  %v1296 = vadd.f32 %v1211, %v1295
  %v1297 = vpop.f32.mrb[0].mxu0
  %1298 = vmatprep.mubr.f32.mxu0 %v250
  %1299 = vmatmul.mubr.f32.gmra.mrb[0].mxu0 %v249
  %v1300 = vpop.f32.mrb[0].mxu0
  %v1301 = vadd.f32 %v1216, %v1300
  %v1302 = vpop.f32.mrb[0].mxu0
  %1303 = vdwg.mxu0
  %vm1304 = vcmask 785408
  %v1306 = vsel %vm1304, %v49, 0
  %v1309 = vsel %vm1304, %v56, 0
  %v1312 = vsel %vm1304, %v63, 0
  %v1315 = vsel %vm1304, %v70, 0
  %1317 = vmatprep.subr.mxu0 0.0
  %1318 = vmatpush1.msra.mxu0 %v71
  %1319 = vmatprep.subr.mxu0 0.0
  %1320 = vmatpush1.msra.mxu0 %v72
  %1321 = vmatprep.subr.mxu0 0.0
  %1322 = vmatpush1.msra.mxu0 %v73
  %1323 = vmatprep.subr.mxu0 0.0
  %1324 = vmatpush1.msra.mxu0 %v74
  %1325 = vmatprep.subr.mxu0 0.0
  %1326 = vmatpush1.msra.mxu0 %v75
  %1327 = vmatprep.subr.mxu0 0.0
  %1328 = vmatpush1.msra.mxu0 %v76
  %1329 = vmatprep.subr.mxu0 0.0
  %1330 = vmatpush1.msra.mxu0 %v77
  %1331 = vmatprep.subr.mxu0 0.0
  %1332 = vmatpush1.msra.mxu0 %v78
  %1333 = vmatprep.subr.mxu0 0.0
  %1334 = vmatpush1.msra.mxu0 %v79
  %1335 = vmatprep.subr.mxu0 0.0
  %1336 = vmatpush1.msra.mxu0 %v80
  %1337 = vmatprep.subr.mxu0 0.0
  %1338 = vmatpush1.msra.mxu0 %v81
  %1339 = vmatprep.subr.mxu0 0.0
  %1340 = vmatpush1.msra.mxu0 %v82
  %1341 = vmatprep.subr.mxu0 0.0
  %1342 = vmatpush1.msra.mxu0 %v83
  %1343 = vmatprep.subr.mxu0 0.0
  %1344 = vmatpush1.msra.mxu0 %v84
  %1345 = vmatprep.subr.mxu0 0.0
  %1346 = vmatpush1.msra.mxu0 %v85
  %1347 = vmatprep.subr.mxu0 0.0
  %1348 = vmatpush1.msra.mxu0 %v86
  %1349 = vmatprep.subr.mxu0 0.0
  %1350 = vmatpush1.msra.mxu0 %v87
  %1351 = vmatprep.subr.mxu0 0.0
  %1352 = vmatpush1.msra.mxu0 %v88
  %1353 = vmatprep.subr.mxu0 0.0
  %1354 = vmatpush1.msra.mxu0 %v89
  %1355 = vmatprep.subr.mxu0 0.0
  %1356 = vmatpush1.msra.mxu0 %v90
  %1357 = vmatprep.subr.mxu0 0.0
  %1358 = vmatpush1.msra.mxu0 %v91
  %1359 = vmatprep.subr.mxu0 0.0
  %1360 = vmatpush1.msra.mxu0 %v92
  %1361 = vmatprep.subr.mxu0 0.0
  %1362 = vmatpush1.msra.mxu0 %v93
  %1363 = vmatprep.subr.mxu0 0.0
  %1364 = vmatpush1.msra.mxu0 %v94
  %1365 = vmatprep.subr.mxu0 0.0
  %1366 = vmatpush1.msra.mxu0 %v95
  %1367 = vmatprep.subr.mxu0 0.0
  %1368 = vmatpush1.msra.mxu0 %v96
  %1369 = vmatprep.subr.mxu0 0.0
  %1370 = vmatpush1.msra.mxu0 %v97
  %1371 = vmatprep.subr.mxu0 0.0
  %1372 = vmatpush1.msra.mxu0 %v98
  %1373 = vmatprep.subr.mxu0 0.0
  %1374 = vmatpush1.msra.mxu0 %v99
  %1375 = vmatprep.subr.mxu0 0.0
  %1376 = vmatpush1.msra.mxu0 %v100
  %1377 = vmatprep.subr.mxu0 0.0
  %1378 = vmatpush1.msra.mxu0 %v101
  %1379 = vmatprep.subr.mxu0 0.0
  %1380 = vmatpush1.msra.mxu0 %v102
  %1381 = vmatprep.mubr.f32.mxu0 %v44
  %1382 = vmatmul.mubr.f32.gmra.mrb[0].mxu0 %v43
  %v1383 = vpop.f32.mrb[0].mxu0
  %v1384 = vadd.f32 %v1286, %v1383
  %v1385 = vpop.f32.mrb[0].mxu0
  %1386 = vmatprep.mubr.f32.mxu0 %v51
  %1387 = vmatmul.mubr.f32.gmra.mrb[0].mxu0 %v50
  %v1388 = vpop.f32.mrb[0].mxu0
  %v1389 = vadd.f32 %v1291, %v1388
  %v1390 = vpop.f32.mrb[0].mxu0
  %1391 = vmatprep.mubr.f32.mxu0 %v58
  %1392 = vmatmul.mubr.f32.gmra.mrb[0].mxu0 %v57
  %v1393 = vpop.f32.mrb[0].mxu0
  %v1394 = vadd.f32 %v1296, %v1393
  %v1395 = vpop.f32.mrb[0].mxu0
  %1396 = vmatprep.mubr.f32.mxu0 %v65
  %1397 = vmatmul.mubr.f32.gmra.mrb[0].mxu0 %v64
  %v1398 = vpop.f32.mrb[0].mxu0
  %v1399 = vadd.f32 %v1301, %v1398
  %v1400 = vpop.f32.mrb[0].mxu0
  %1401 = vdwg.mxu0
  %1402 = vmatprep.subr.mxu0 0.0
  %1403 = vmatpush1.msra.mxu0 %v103
  %1404 = vmatprep.subr.mxu0 0.0
  %1405 = vmatpush1.msra.mxu0 %v104
  %1406 = vmatprep.subr.mxu0 0.0
  %1407 = vmatpush1.msra.mxu0 %v105
  %1408 = vmatprep.subr.mxu0 0.0
  %1409 = vmatpush1.msra.mxu0 %v106
  %1410 = vmatprep.subr.mxu0 0.0
  %1411 = vmatpush1.msra.mxu0 %v107
  %1412 = vmatprep.subr.mxu0 0.0
  %1413 = vmatpush1.msra.mxu0 %v108
  %1414 = vmatprep.subr.mxu0 0.0
  %1415 = vmatpush1.msra.mxu0 %v109
  %1416 = vmatprep.subr.mxu0 0.0
  %1417 = vmatpush1.msra.mxu0 %v110
  %1418 = vmatprep.subr.mxu0 0.0
  %1419 = vmatpush1.msra.mxu0 %v111
  %1420 = vmatprep.subr.mxu0 0.0
  %1421 = vmatpush1.msra.mxu0 %v112
  %1422 = vmatprep.subr.mxu0 0.0
  %1423 = vmatpush1.msra.mxu0 %v113
  %1424 = vmatprep.subr.mxu0 0.0
  %1425 = vmatpush1.msra.mxu0 %v114
  %1426 = vmatprep.subr.mxu0 0.0
  %1427 = vmatpush1.msra.mxu0 %v115
  %1428 = vmatprep.subr.mxu0 0.0
  %1429 = vmatpush1.msra.mxu0 %v116
  %1430 = vmatprep.subr.mxu0 0.0
  %1431 = vmatpush1.msra.mxu0 %v117
  %1432 = vmatprep.subr.mxu0 0.0
  %1433 = vmatpush1.msra.mxu0 %v118
  %1434 = vmatprep.subr.mxu0 0.0
  %1435 = vmatpush1.msra.mxu0 %v119
  %1436 = vmatprep.subr.mxu0 0.0
  %1437 = vmatpush1.msra.mxu0 %v120
  %1438 = vmatprep.subr.mxu0 0.0
  %1439 = vmatpush1.msra.mxu0 %v121
  %1440 = vmatprep.subr.mxu0 0.0
  %1441 = vmatpush1.msra.mxu0 %v122
  %1442 = vmatprep.subr.mxu0 0.0
  %1443 = vmatpush1.msra.mxu0 %v123
  %1444 = vmatprep.subr.mxu0 0.0
  %1445 = vmatpush1.msra.mxu0 %v124
  %1446 = vmatprep.subr.mxu0 0.0
  %1447 = vmatpush1.msra.mxu0 %v125
  %1448 = vmatprep.subr.mxu0 0.0
  %1449 = vmatpush1.msra.mxu0 %v126
  %1450 = vmatprep.subr.mxu0 0.0
  %1451 = vmatpush1.msra.mxu0 %v127
  %1452 = vmatprep.subr.mxu0 0.0
  %1453 = vmatpush1.msra.mxu0 %v128
  %1454 = vmatprep.subr.mxu0 0.0
  %1455 = vmatpush1.msra.mxu0 %v129
  %1456 = vmatprep.subr.mxu0 0.0
  %1457 = vmatpush1.msra.mxu0 %v130
  %1458 = vmatprep.subr.mxu0 0.0
  %1459 = vmatpush1.msra.mxu0 %v131
  %1460 = vmatprep.subr.mxu0 0.0
  %1461 = vmatpush1.msra.mxu0 %v132
  %1462 = vmatprep.subr.mxu0 0.0
  %1463 = vmatpush1.msra.mxu0 %v133
  %1464 = vmatprep.subr.mxu0 0.0
  %1465 = vmatpush1.msra.mxu0 %v134
  %1466 = vmatprep.mubr.f32.mxu0 %v46
  %1467 = vmatmul.mubr.f32.gmra.mrb[0].mxu0 %v45
  %v1468 = vpop.f32.mrb[0].mxu0
  %v1469 = vadd.f32 %v1384, %v1468
  %v1470 = vpop.f32.mrb[0].mxu0
  %1471 = vmatprep.mubr.f32.mxu0 %v53
  %1472 = vmatmul.mubr.f32.gmra.mrb[0].mxu0 %v52
  %v1473 = vpop.f32.mrb[0].mxu0
  %v1474 = vadd.f32 %v1389, %v1473
  %v1475 = vpop.f32.mrb[0].mxu0
  %1476 = vmatprep.mubr.f32.mxu0 %v60
  %1477 = vmatmul.mubr.f32.gmra.mrb[0].mxu0 %v59
  %v1478 = vpop.f32.mrb[0].mxu0
  %v1479 = vadd.f32 %v1394, %v1478
  %v1480 = vpop.f32.mrb[0].mxu0
  %1481 = vmatprep.mubr.f32.mxu0 %v67
  %1482 = vmatmul.mubr.f32.gmra.mrb[0].mxu0 %v66
  %v1483 = vpop.f32.mrb[0].mxu0
  %v1484 = vadd.f32 %v1399, %v1483
  %v1485 = vpop.f32.mrb[0].mxu0
  %1486 = vdwg.mxu0
  %1487 = vmatprep.subr.mxu0 0.0
  %1488 = vmatpush1.msra.mxu0 %v135
  %1489 = vmatprep.subr.mxu0 0.0
  %1490 = vmatpush1.msra.mxu0 %v136
  %1491 = vmatprep.subr.mxu0 0.0
  %1492 = vmatpush1.msra.mxu0 %v137
  %1493 = vmatprep.subr.mxu0 0.0
  %1494 = vmatpush1.msra.mxu0 %v138
  %1495 = vmatprep.subr.mxu0 0.0
  %1496 = vmatpush1.msra.mxu0 %v139
  %1497 = vmatprep.subr.mxu0 0.0
  %1498 = vmatpush1.msra.mxu0 %v140
  %1499 = vmatprep.subr.mxu0 0.0
  %1500 = vmatpush1.msra.mxu0 %v141
  %1501 = vmatprep.subr.mxu0 0.0
  %1502 = vmatpush1.msra.mxu0 %v142
  %1503 = vmatprep.subr.mxu0 0.0
  %1504 = vmatpush1.msra.mxu0 %v143
  %1505 = vmatprep.subr.mxu0 0.0
  %1506 = vmatpush1.msra.mxu0 %v144
  %1507 = vmatprep.subr.mxu0 0.0
  %1508 = vmatpush1.msra.mxu0 %v145
  %1509 = vmatprep.subr.mxu0 0.0
  %1510 = vmatpush1.msra.mxu0 %v146
  %1511 = vmatprep.subr.mxu0 0.0
  %1512 = vmatpush1.msra.mxu0 %v147
  %1513 = vmatprep.subr.mxu0 0.0
  %1514 = vmatpush1.msra.mxu0 %v148
  %1515 = vmatprep.subr.mxu0 0.0
  %1516 = vmatpush1.msra.mxu0 %v149
  %1517 = vmatprep.subr.mxu0 0.0
  %1518 = vmatpush1.msra.mxu0 %v150
  %1519 = vmatprep.subr.mxu0 0.0
  %1520 = vmatpush1.msra.mxu0 %v151
  %1521 = vmatprep.subr.mxu0 0.0
  %1522 = vmatpush1.msra.mxu0 %v152
  %1523 = vmatprep.subr.mxu0 0.0
  %1524 = vmatpush1.msra.mxu0 %v153
  %1525 = vmatprep.subr.mxu0 0.0
  %1526 = vmatpush1.msra.mxu0 %v154
  %1527 = vmatprep.subr.mxu0 0.0
  %1528 = vmatpush1.msra.mxu0 %v155
  %1529 = vmatprep.subr.mxu0 0.0
  %1530 = vmatpush1.msra.mxu0 %v156
  %1531 = vmatprep.subr.mxu0 0.0
  %1532 = vmatpush1.msra.mxu0 %v157
  %1533 = vmatprep.subr.mxu0 0.0
  %1534 = vmatpush1.msra.mxu0 %v158
  %1535 = vmatprep.subr.mxu0 0.0
  %1536 = vmatpush1.msra.mxu0 %v159
  %1537 = vmatprep.subr.mxu0 0.0
  %1538 = vmatpush1.msra.mxu0 %v160
  %1539 = vmatprep.subr.mxu0 0.0
  %1540 = vmatpush1.msra.mxu0 %v161
  %1541 = vmatprep.subr.mxu0 0.0
  %1542 = vmatpush1.msra.mxu0 %v162
  %1543 = vmatprep.subr.mxu0 0.0
  %1544 = vmatpush1.msra.mxu0 %v163
  %1545 = vmatprep.subr.mxu0 0.0
  %1546 = vmatpush1.msra.mxu0 %v164
  %1547 = vmatprep.subr.mxu0 0.0
  %1548 = vmatpush1.msra.mxu0 %v165
  %1549 = vmatprep.subr.mxu0 0.0
  %1550 = vmatpush1.msra.mxu0 %v166
  %1551 = vmatprep.mubr.f32.mxu0 %v48
  %1552 = vmatmul.mubr.f32.gmra.mrb[0].mxu0 %v47
  %v1553 = vpop.f32.mrb[0].mxu0
  %v1554 = vadd.f32 %v1469, %v1553
  %v1555 = vpop.f32.mrb[0].mxu0
  %1556 = vmatprep.mubr.f32.mxu0 %v55
  %1557 = vmatmul.mubr.f32.gmra.mrb[0].mxu0 %v54
  %v1558 = vpop.f32.mrb[0].mxu0
  %v1559 = vadd.f32 %v1474, %v1558
  %v1560 = vpop.f32.mrb[0].mxu0
  %1561 = vmatprep.mubr.f32.mxu0 %v62
  %1562 = vmatmul.mubr.f32.gmra.mrb[0].mxu0 %v61
  %v1563 = vpop.f32.mrb[0].mxu0
  %v1564 = vadd.f32 %v1479, %v1563
  %v1565 = vpop.f32.mrb[0].mxu0
  %1566 = vmatprep.mubr.f32.mxu0 %v69
  %1567 = vmatmul.mubr.f32.gmra.mrb[0].mxu0 %v68
  %v1568 = vpop.f32.mrb[0].mxu0
  %v1569 = vadd.f32 %v1484, %v1568
  %v1570 = vpop.f32.mrb[0].mxu0
  %1571 = vdwg.mxu0
  %1572 = vmatprep.subr.mxu0 0.0
  %1573 = vmatpush1.msra.mxu0 %v167
  %1574 = vmatprep.subr.mxu0 0.0
  %1575 = vmatpush1.msra.mxu0 %v168
  %1576 = vmatprep.subr.mxu0 0.0
  %1577 = vmatpush1.msra.mxu0 %v169
  %1578 = vmatprep.subr.mxu0 0.0
  %1579 = vmatpush1.msra.mxu0 %v170
  %1580 = vmatprep.subr.mxu0 0.0
  %1581 = vmatpush1.msra.mxu0 %v171
  %1582 = vmatprep.subr.mxu0 0.0
  %1583 = vmatpush1.msra.mxu0 %v172
  %1584 = vmatprep.subr.mxu0 0.0
  %1585 = vmatpush1.msra.mxu0 %v173
  %1586 = vmatprep.subr.mxu0 0.0
  %1587 = vmatpush1.msra.mxu0 %v174
  %1588 = vmatprep.subr.mxu0 0.0
  %1589 = vmatpush1.msra.mxu0 %v175
  %1590 = vmatprep.subr.mxu0 0.0
  %1591 = vmatpush1.msra.mxu0 %v176
  %1592 = vmatprep.subr.mxu0 0.0
  %1593 = vmatpush1.msra.mxu0 %v177
  %1594 = vmatprep.subr.mxu0 0.0
  %1595 = vmatpush1.msra.mxu0 %v178
  %1596 = vmatprep.subr.mxu0 0.0
  %1597 = vmatpush1.msra.mxu0 0.0
  %1598 = vmatprep.subr.mxu0 0.0
  %1599 = vmatpush1.msra.mxu0 0.0
  %1600 = vmatprep.subr.mxu0 0.0
  %1601 = vmatpush1.msra.mxu0 0.0
  %1602 = vmatprep.subr.mxu0 0.0
  %1603 = vmatpush1.msra.mxu0 0.0
  %1604 = vmatprep.subr.mxu0 0.0
  %1605 = vmatpush1.msra.mxu0 0.0
  %1606 = vmatprep.subr.mxu0 0.0
  %1607 = vmatpush1.msra.mxu0 0.0
  %1608 = vmatprep.subr.mxu0 0.0
  %1609 = vmatpush1.msra.mxu0 0.0
  %1610 = vmatprep.subr.mxu0 0.0
  %1611 = vmatpush1.msra.mxu0 0.0
  %1612 = vmatprep.subr.mxu0 0.0
  %1613 = vmatpush1.msra.mxu0 0.0
  %1614 = vmatprep.subr.mxu0 0.0
  %1615 = vmatpush1.msra.mxu0 0.0
  %1616 = vmatprep.subr.mxu0 0.0
  %1617 = vmatpush1.msra.mxu0 0.0
  %1618 = vmatprep.subr.mxu0 0.0
  %1619 = vmatpush1.msra.mxu0 0.0
  %1620 = vmatprep.subr.mxu0 0.0
  %1621 = vmatpush1.msra.mxu0 0.0
  %1622 = vmatprep.subr.mxu0 0.0
  %1623 = vmatpush1.msra.mxu0 0.0
  %1624 = vmatprep.subr.mxu0 0.0
  %1625 = vmatpush1.msra.mxu0 0.0
  %1626 = vmatprep.subr.mxu0 0.0
  %1627 = vmatpush1.msra.mxu0 0.0
  %1628 = vmatprep.subr.mxu0 0.0
  %1629 = vmatpush1.msra.mxu0 0.0
  %1630 = vmatprep.subr.mxu0 0.0
  %1631 = vmatpush1.msra.mxu0 0.0
  %1632 = vmatprep.subr.mxu0 0.0
  %1633 = vmatpush1.msra.mxu0 0.0
  %1634 = vmatprep.subr.mxu0 0.0
  %1635 = vmatpush1.msra.mxu0 0.0
  %1636 = vmatprep.mubr.f32.mxu0 0.0
  %1637 = vmatmul.mubr.f32.gmra.mrb[0].mxu0 %v1306
  %v1638 = vpop.f32.mrb[0].mxu0
  %v1639 = vadd.f32 %v1554, %v1638
  %v1640 = vpop.f32.mrb[0].mxu0
  %1641 = vmatprep.mubr.f32.mxu0 0.0
  %1642 = vmatmul.mubr.f32.gmra.mrb[0].mxu0 %v1309
  %v1643 = vpop.f32.mrb[0].mxu0
  %v1644 = vadd.f32 %v1559, %v1643
  %v1645 = vpop.f32.mrb[0].mxu0
  %1646 = vmatprep.mubr.f32.mxu0 0.0
  %1647 = vmatmul.mubr.f32.gmra.mrb[0].mxu0 %v1312
  %v1648 = vpop.f32.mrb[0].mxu0
  %v1649 = vadd.f32 %v1564, %v1648
  %v1650 = vpop.f32.mrb[0].mxu0
  %1651 = vmatprep.mubr.f32.mxu0 0.0
  %1652 = vmatmul.mubr.f32.gmra.mrb[0].mxu0 %v1315
  %v1653 = vpop.f32.mrb[0].mxu0
  %v1654 = vadd.f32 %v1569, %v1653
  %v1655 = vpop.f32.mrb[0].mxu0
  %1656 = vdwg.mxu0
  %v1657 = vld [vmem:[%s4] sm:$0x1]
  %v1659 = vlaneseq
  %v1660 = vshrl.u32 %v1659, 7
  %v1661 = vsub.s32 0, %v1660
  %v1662 = vrot.slane %v1657, %v1661
  %v1664 = vadd.f32 %v1639, %v1662
  %v1665 = vadd.f32 %v1644, %v1662
  %v1666 = vadd.f32 %v1649, %v1662
  %v1667 = vadd.f32 %v1654, %v1662
  %v1668 = vlaneseq
  %v1669 = vshrl.u32 %v1668, 7
  %v1670 = vadd.s32 %v1669, 8
  %v1671 = vadd.s32 %v1669, 16
  %v1672 = vadd.s32 %v1669, 24
  %vm1673 = vcmp.lt.s32.totalorder %v1669, 0
  %v1674 = vsub.s32 0, %v1669
  %v1675 = vsel %vm1673, %v1674, %v1669
  %v1676 = vshrl.u32 %v1675, 4
  %v1677 = vand.u32 %v1675, 15
  %v1678 = vsub.s32 0, %v1677
  %v1679 = vsel %vm1673, %v1678, %v1677
  %vm1680 = vcmp.lt.s32.totalorder %v1670, 0
  %v1681 = vsub.s32 0, %v1670
  %v1682 = vsel %vm1680, %v1681, %v1670
  %v1683 = vshrl.u32 %v1682, 4
  %v1684 = vand.u32 %v1682, 15
  %v1685 = vsub.s32 0, %v1684
  %v1686 = vsel %vm1680, %v1685, %v1684
  %vm1687 = vcmp.lt.s32.totalorder %v1671, 0
  %v1688 = vsub.s32 0, %v1671
  %v1689 = vsel %vm1687, %v1688, %v1671
  %v1690 = vshrl.u32 %v1689, 4
  %v1691 = vand.u32 %v1689, 15
  %v1692 = vsub.s32 0, %v1691
  %v1693 = vsel %vm1687, %v1692, %v1691
  %vm1694 = vcmp.lt.s32.totalorder %v1672, 0
  %v1695 = vsub.s32 0, %v1672
  %v1696 = vsel %vm1694, %v1695, %v1672
  %v1697 = vshrl.u32 %v1696, 4
  %v1698 = vand.u32 %v1696, 15
  %v1699 = vsub.s32 0, %v1698
  %v1700 = vsel %vm1694, %v1699, %v1698
  %vm1701 = vcmp.ne.s32.totalorder %v1679, 0
  %vm1702 = vcmp.ne.s32.totalorder %v1686, 0
  %vm1703 = vcmp.ne.s32.totalorder %v1693, 0
  %vm1704 = vcmp.ne.s32.totalorder %v1700, 0
  %vm1705 = vcmp.lt.s32.totalorder %v1679, 0
  %vm1706 = vcmp.lt.s32.totalorder %v1686, 0
  %vm1707 = vcmp.lt.s32.totalorder %v1693, 0
  %vm1708 = vcmp.lt.s32.totalorder %v1700, 0
  %vm1709 = vmand %vm1705, %vm1701
  %vm1710 = vmand %vm1706, %vm1702
  %vm1711 = vmand %vm1707, %vm1703
  %vm1712 = vmand %vm1708, %vm1704
  %v1713 = vadd.s32 %v1679, 16
  %v1714 = vadd.s32 %v1686, 16
  %v1715 = vadd.s32 %v1693, 16
  %v1716 = vadd.s32 %v1700, 16
  %v1717 = vsel %vm1709, %v1713, %v1679
  %v1718 = vsel %vm1710, %v1714, %v1686
  %v1719 = vsel %vm1711, %v1715, %v1693
  %v1720 = vsel %vm1712, %v1716, %v1700
  %v1721 = vrot.slane %v1664, 7
  %v1722 = vrot.slane %v1665, 7
  %v1723 = vrot.slane %v1666, 7
  %v1724 = vrot.slane %v1667, 7
  %vm1725 = vcmp.lt.s32.totalorder %v1669, 1
  %v1726 = vsel %vm1725, %v1723, %v1724
  %v1727 = vsel %vm1725, %v1722, %v1723
  %v1728 = vsel %vm1725, %v1721, %v1722
  %v1729 = vsel %vm1725, %v1724, %v1721
  %vm1730 = vcmp.eq.s32.totalorder %v1717, 0
  %vm1731 = vcmp.eq.s32.totalorder %v1718, 0
  %vm1732 = vcmp.eq.s32.totalorder %v1719, 0
  %vm1733 = vcmp.eq.s32.totalorder %v1720, 0
  %v1734 = vsel %vm1730, 0.0, %v1729
  %v1735 = vsel %vm1731, 0.0, %v1728
  %v1736 = vsel %vm1732, 0.0, %v1727
  %v1737 = vsel %vm1733, 0.0, %v1726
  %v1738 = vrot.slane %v1664, 1
  %v1739 = vrot.slane %v1665, 1
  %v1740 = vrot.slane %v1666, 1
  %v1741 = vrot.slane %v1667, 1
  %vm1742 = vcmp.lt.s32.totalorder %v1669, 7
  %v1743 = vsel %vm1742, %v1740, %v1741
  %v1744 = vsel %vm1742, %v1739, %v1740
  %v1745 = vsel %vm1742, %v1738, %v1739
  %v1746 = vsel %vm1742, %v1741, %v1738
  %vm1747 = vcmp.eq.s32.totalorder %v1717, 15
  %vm1748 = vcmp.eq.s32.totalorder %v1718, 15
  %vm1749 = vcmp.eq.s32.totalorder %v1719, 15
  %vm1750 = vcmp.eq.s32.totalorder %v1720, 15
  %v1751 = vsel %vm1747, 0.0, %v1745
  %v1752 = vsel %vm1748, 0.0, %v1744
  %v1753 = vsel %vm1749, 0.0, %v1743
  %v1754 = vsel %vm1750, 0.0, %v1746
  %1759 = vrot.lane.b32.xlu0 %v1664, 32
  %v1760 = vpop.permute.xlu0 %1759
  %1761 = vrot.lane.b32.xlu0 %v1665, 32
  %v1762 = vpop.permute.xlu0 %1761
  %1763 = vrot.lane.b32.xlu0 %v1666, 32
  %v1764 = vpop.permute.xlu0 %1763
  %1765 = vrot.lane.b32.xlu0 %v1667, 32
  %v1766 = vpop.permute.xlu0 %1765
  %1775 = vrot.lane.b32.xlu0 %v1751, 64
  %v1776 = vpop.permute.xlu0 %1775
  %1777 = vrot.lane.b32.xlu0 %v1752, 64
  %v1778 = vpop.permute.xlu0 %1777
  %1779 = vrot.lane.b32.xlu0 %v1753, 64
  %v1780 = vpop.permute.xlu0 %1779
  %1781 = vrot.lane.b32.xlu0 %v1754, 64
  %v1782 = vpop.permute.xlu0 %1781
  %vm1787 = vcmask 261120
  %v1788 = vsel %vm1787, %v1734, %v1760
  %v1789 = vsel %vm1787, %v1735, %v1762
  %v1790 = vsel %vm1787, %v1736, %v1764
  %v1791 = vsel %vm1787, %v1737, %v1766
  %vm1792 = vcmask 523264
  %v1793 = vsel %vm1792, %v1788, %v1776
  %v1794 = vsel %vm1792, %v1789, %v1778
  %v1795 = vsel %vm1792, %v1790, %v1780
  %v1796 = vsel %vm1792, %v1791, %v1782
  %v1797 = vld [vmem:[%s5] sm:$0xff]
  %v1798 = vld [vmem:[%s5 + $0x8] sm:$0xff]
  %v1799 = vld [vmem:[%s5 + $0x10] sm:$0xff]
  %v1800 = vld [vmem:[%s5 + $0x18] sm:$0xff]
  %v1801 = vld [vmem:[%s5 + $0x20] sm:$0xff]
  %v1802 = vld [vmem:[%s5 + $0x28] sm:$0xff]
  %v1803 = vld [vmem:[%s5 + $0x30] sm:$0xff]
  %v1804 = vld [vmem:[%s5 + $0x38] sm:$0xff]
  %v1805 = vld [vmem:[%s5 + $0x40] sm:$0xff]
  %v1806 = vld [vmem:[%s5 + $0x48] sm:$0xff]
  %v1807 = vld [vmem:[%s5 + $0x50] sm:$0xff]
  %v1808 = vld [vmem:[%s5 + $0x58] sm:$0xff]
  %v1809 = vld [vmem:[%s6] sm:$0x1]
  %v1811 = vlaneseq
  %v1812 = vshrl.u32 %v1811, 7
  %v1813 = vsub.s32 0, %v1812
  %v1814 = vrot.slane %v1809, %v1813
  %v1817 = vsel %vm1304, %v1793, 0
  %v1820 = vsel %vm1304, %v1794, 0
  %v1823 = vsel %vm1304, %v1795, 0
  %v1826 = vsel %vm1304, %v1796, 0
  %1828 = vmatprep.subr.mxu0 0.0
  %1829 = vmatpush1.msra.mxu0 %v1797
  %1830 = vmatprep.subr.mxu0 0.0
  %1831 = vmatpush1.msra.mxu0 %v1798
  %1832 = vmatprep.subr.mxu0 0.0
  %1833 = vmatpush1.msra.mxu0 %v1799
  %1834 = vmatprep.subr.mxu0 0.0
  %1835 = vmatpush1.msra.mxu0 %v1800
  %1836 = vmatprep.subr.mxu0 0.0
  %1837 = vmatpush1.msra.mxu0 %v1801
  %1838 = vmatprep.subr.mxu0 0.0
  %1839 = vmatpush1.msra.mxu0 %v1802
  %1840 = vmatprep.subr.mxu0 0.0
  %1841 = vmatpush1.msra.mxu0 %v1803
  %1842 = vmatprep.subr.mxu0 0.0
  %1843 = vmatpush1.msra.mxu0 %v1804
  %1844 = vmatprep.subr.mxu0 0.0
  %1845 = vmatpush1.msra.mxu0 %v1805
  %1846 = vmatprep.subr.mxu0 0.0
  %1847 = vmatpush1.msra.mxu0 %v1806
  %1848 = vmatprep.subr.mxu0 0.0
  %1849 = vmatpush1.msra.mxu0 %v1807
  %1850 = vmatprep.subr.mxu0 0.0
  %1851 = vmatpush1.msra.mxu0 %v1808
  %1852 = vmatprep.subr.mxu0 0.0
  %1853 = vmatpush1.msra.mxu0 0.0
  %1854 = vmatprep.subr.mxu0 0.0
  %1855 = vmatpush1.msra.mxu0 0.0
  %1856 = vmatprep.subr.mxu0 0.0
  %1857 = vmatpush1.msra.mxu0 0.0
  %1858 = vmatprep.subr.mxu0 0.0
  %1859 = vmatpush1.msra.mxu0 0.0
  %1860 = vmatprep.subr.mxu0 0.0
  %1861 = vmatpush1.msra.mxu0 0.0
  %1862 = vmatprep.subr.mxu0 0.0
  %1863 = vmatpush1.msra.mxu0 0.0
  %1864 = vmatprep.subr.mxu0 0.0
  %1865 = vmatpush1.msra.mxu0 0.0
  %1866 = vmatprep.subr.mxu0 0.0
  %1867 = vmatpush1.msra.mxu0 0.0
  %1868 = vmatprep.subr.mxu0 0.0
  %1869 = vmatpush1.msra.mxu0 0.0
  %1870 = vmatprep.subr.mxu0 0.0
  %1871 = vmatpush1.msra.mxu0 0.0
  %1872 = vmatprep.subr.mxu0 0.0
  %1873 = vmatpush1.msra.mxu0 0.0
  %1874 = vmatprep.subr.mxu0 0.0
  %1875 = vmatpush1.msra.mxu0 0.0
  %1876 = vmatprep.subr.mxu0 0.0
  %1877 = vmatpush1.msra.mxu0 0.0
  %1878 = vmatprep.subr.mxu0 0.0
  %1879 = vmatpush1.msra.mxu0 0.0
  %1880 = vmatprep.subr.mxu0 0.0
  %1881 = vmatpush1.msra.mxu0 0.0
  %1882 = vmatprep.subr.mxu0 0.0
  %1883 = vmatpush1.msra.mxu0 0.0
  %1884 = vmatprep.subr.mxu0 0.0
  %1885 = vmatpush1.msra.mxu0 0.0
  %1886 = vmatprep.subr.mxu0 0.0
  %1887 = vmatpush1.msra.mxu0 0.0
  %1888 = vmatprep.subr.mxu0 0.0
  %1889 = vmatpush1.msra.mxu0 0.0
  %1890 = vmatprep.subr.mxu0 0.0
  %1891 = vmatpush1.msra.mxu0 0.0
  %1892 = vmatprep.mubr.f32.mxu0 0.0
  %1893 = vmatmul.mubr.f32.gmra.mrb[0].mxu0 %v1817
  %v1894 = vpop.f32.mrb[0].mxu0
  %v1895 = vadd.f32 %v1814, %v1894
  %v1896 = vpop.f32.mrb[0].mxu0
  %1897 = vmatprep.mubr.f32.mxu0 0.0
  %1898 = vmatmul.mubr.f32.gmra.mrb[0].mxu0 %v1820
  %v1899 = vpop.f32.mrb[0].mxu0
  %v1900 = vadd.f32 %v1814, %v1899
  %v1901 = vpop.f32.mrb[0].mxu0
  %1902 = vmatprep.mubr.f32.mxu0 0.0
  %1903 = vmatmul.mubr.f32.gmra.mrb[0].mxu0 %v1823
  %v1904 = vpop.f32.mrb[0].mxu0
  %v1905 = vadd.f32 %v1814, %v1904
  %v1906 = vpop.f32.mrb[0].mxu0
  %1907 = vmatprep.mubr.f32.mxu0 0.0
  %1908 = vmatmul.mubr.f32.gmra.mrb[0].mxu0 %v1826
  %v1909 = vpop.f32.mrb[0].mxu0
  %v1910 = vadd.f32 %v1814, %v1909
  %v1911 = vpop.f32.mrb[0].mxu0
  %1912 = vdwg.mxu0
  %v1913 = vld [vmem:[%s7] sm:$0xff]
  %v1914 = vld [vmem:[%s7 + $0x8] sm:$0xff]
  %v1915 = vld [vmem:[%s8] sm:$0x1]
  %v1917 = vlaneseq
  %v1918 = vshrl.u32 %v1917, 7
  %v1919 = vsub.s32 0, %v1918
  %v1920 = vrot.slane %v1915, %v1919
  %vm1922 = vcmask 130048
  %v1924 = vsel %vm1922, %v1895, 0
  %v1927 = vsel %vm1922, %v1900, 0
  %v1930 = vsel %vm1922, %v1905, 0
  %v1933 = vsel %vm1922, %v1910, 0
  %1935 = vmatprep.subr.mxu0 0.0
  %1936 = vmatpush1.msra.mxu0 %v1913
  %1937 = vmatprep.subr.mxu0 0.0
  %1938 = vmatpush1.msra.mxu0 %v1914
  %1939 = vmatprep.subr.mxu0 0.0
  %1940 = vmatpush1.msra.mxu0 0.0
  %1941 = vmatprep.subr.mxu0 0.0
  %1942 = vmatpush1.msra.mxu0 0.0
  %1943 = vmatprep.subr.mxu0 0.0
  %1944 = vmatpush1.msra.mxu0 0.0
  %1945 = vmatprep.subr.mxu0 0.0
  %1946 = vmatpush1.msra.mxu0 0.0
  %1947 = vmatprep.subr.mxu0 0.0
  %1948 = vmatpush1.msra.mxu0 0.0
  %1949 = vmatprep.subr.mxu0 0.0
  %1950 = vmatpush1.msra.mxu0 0.0
  %1951 = vmatprep.subr.mxu0 0.0
  %1952 = vmatpush1.msra.mxu0 0.0
  %1953 = vmatprep.subr.mxu0 0.0
  %1954 = vmatpush1.msra.mxu0 0.0
  %1955 = vmatprep.subr.mxu0 0.0
  %1956 = vmatpush1.msra.mxu0 0.0
  %1957 = vmatprep.subr.mxu0 0.0
  %1958 = vmatpush1.msra.mxu0 0.0
  %1959 = vmatprep.subr.mxu0 0.0
  %1960 = vmatpush1.msra.mxu0 0.0
  %1961 = vmatprep.subr.mxu0 0.0
  %1962 = vmatpush1.msra.mxu0 0.0
  %1963 = vmatprep.subr.mxu0 0.0
  %1964 = vmatpush1.msra.mxu0 0.0
  %1965 = vmatprep.subr.mxu0 0.0
  %1966 = vmatpush1.msra.mxu0 0.0
  %1967 = vmatprep.subr.mxu0 0.0
  %1968 = vmatpush1.msra.mxu0 0.0
  %1969 = vmatprep.subr.mxu0 0.0
  %1970 = vmatpush1.msra.mxu0 0.0
  %1971 = vmatprep.subr.mxu0 0.0
  %1972 = vmatpush1.msra.mxu0 0.0
  %1973 = vmatprep.subr.mxu0 0.0
  %1974 = vmatpush1.msra.mxu0 0.0
  %1975 = vmatprep.subr.mxu0 0.0
  %1976 = vmatpush1.msra.mxu0 0.0
  %1977 = vmatprep.subr.mxu0 0.0
  %1978 = vmatpush1.msra.mxu0 0.0
  %1979 = vmatprep.subr.mxu0 0.0
  %1980 = vmatpush1.msra.mxu0 0.0
  %1981 = vmatprep.subr.mxu0 0.0
  %1982 = vmatpush1.msra.mxu0 0.0
  %1983 = vmatprep.subr.mxu0 0.0
  %1984 = vmatpush1.msra.mxu0 0.0
  %1985 = vmatprep.subr.mxu0 0.0
  %1986 = vmatpush1.msra.mxu0 0.0
  %1987 = vmatprep.subr.mxu0 0.0
  %1988 = vmatpush1.msra.mxu0 0.0
  %1989 = vmatprep.subr.mxu0 0.0
  %1990 = vmatpush1.msra.mxu0 0.0
  %1991 = vmatprep.subr.mxu0 0.0
  %1992 = vmatpush1.msra.mxu0 0.0
  %1993 = vmatprep.subr.mxu0 0.0
  %1994 = vmatpush1.msra.mxu0 0.0
  %1995 = vmatprep.subr.mxu0 0.0
  %1996 = vmatpush1.msra.mxu0 0.0
  %1997 = vmatprep.subr.mxu0 0.0
  %1998 = vmatpush1.msra.mxu0 0.0
  %1999 = vmatprep.mubr.f32.mxu0 0.0
  %2000 = vmatmul.mubr.f32.gmra.mrb[0].mxu0 %v1924
  %v2001 = vpop.f32.mrb[0].mxu0
  %v2002 = vadd.f32 %v1920, %v2001
  %v2003 = vpop.f32.mrb[0].mxu0
  %2004 = vmatprep.mubr.f32.mxu0 0.0
  %2005 = vmatmul.mubr.f32.gmra.mrb[0].mxu0 %v1927
  %v2006 = vpop.f32.mrb[0].mxu0
  %v2007 = vadd.f32 %v1920, %v2006
  %v2008 = vpop.f32.mrb[0].mxu0
  %2009 = vmatprep.mubr.f32.mxu0 0.0
  %2010 = vmatmul.mubr.f32.gmra.mrb[0].mxu0 %v1930
  %v2011 = vpop.f32.mrb[0].mxu0
  %v2012 = vadd.f32 %v1920, %v2011
  %v2013 = vpop.f32.mrb[0].mxu0
  %2014 = vmatprep.mubr.f32.mxu0 0.0
  %2015 = vmatmul.mubr.f32.gmra.mrb[0].mxu0 %v1933
  %v2016 = vpop.f32.mrb[0].mxu0
  %v2017 = vadd.f32 %v1920, %v2016
  %v2018 = vpop.f32.mrb[0].mxu0
  %2019 = vdwg.mxu0
  %2020 = vst [vmem:[%s12] sm:$0xff] %v2002
  %2021 = vst [vmem:[%s12 + $0x8] sm:$0xff] %v2007
  %2022 = vst [vmem:[%s12 + $0x10] sm:$0xff] %v2012
  %2023 = vst [vmem:[%s12 + $0x18] sm:$0xff] %v2017
  %v2024 = vld [vmem:[%s9] sm:$0xff]
  %v2026 = vsel %vm1787, %v2024, 0
  %v2028 = vsel %vm1787, %v1664, 0
  %v2030 = vsel %vm1787, %v1665, 0
  %2032 = vmatprep.subr.mxu0 0.0
  %2033 = vmatpush1.xpose.msra.mxu0 %v2028
  %2034 = vmatprep.subr.mxu0 0.0
  %2035 = vmatpush1.xpose.msra.mxu0 %v2030
  %2036 = vmatprep.subr.mxu0 0.0
  %2037 = vmatpush1.xpose.msra.mxu0 0.0
  %2038 = vmatprep.subr.mxu0 0.0
  %2039 = vmatpush1.xpose.msra.mxu0 0.0
  %2040 = vmatprep.subr.mxu0 0.0
  %2041 = vmatpush1.xpose.msra.mxu0 0.0
  %2042 = vmatprep.subr.mxu0 0.0
  %2043 = vmatpush1.xpose.msra.mxu0 0.0
  %2044 = vmatprep.subr.mxu0 0.0
  %2045 = vmatpush1.xpose.msra.mxu0 0.0
  %2046 = vmatprep.subr.mxu0 0.0
  %2047 = vmatpush1.xpose.msra.mxu0 0.0
  %2048 = vmatprep.subr.mxu0 0.0
  %2049 = vmatpush1.xpose.msra.mxu0 0.0
  %2050 = vmatprep.subr.mxu0 0.0
  %2051 = vmatpush1.xpose.msra.mxu0 0.0
  %2052 = vmatprep.subr.mxu0 0.0
  %2053 = vmatpush1.xpose.msra.mxu0 0.0
  %2054 = vmatprep.subr.mxu0 0.0
  %2055 = vmatpush1.xpose.msra.mxu0 0.0
  %2056 = vmatprep.subr.mxu0 0.0
  %2057 = vmatpush1.xpose.msra.mxu0 0.0
  %2058 = vmatprep.subr.mxu0 0.0
  %2059 = vmatpush1.xpose.msra.mxu0 0.0
  %2060 = vmatprep.subr.mxu0 0.0
  %2061 = vmatpush1.xpose.msra.mxu0 0.0
  %2062 = vmatprep.subr.mxu0 0.0
  %2063 = vmatpush1.xpose.msra.mxu0 0.0
  %2064 = vmatprep.subr.mxu0 0.0
  %2065 = vmatpush1.xpose.msra.mxu0 0.0
  %2066 = vmatprep.subr.mxu0 0.0
  %2067 = vmatpush1.xpose.msra.mxu0 0.0
  %2068 = vmatprep.subr.mxu0 0.0
  %2069 = vmatpush1.xpose.msra.mxu0 0.0
  %2070 = vmatprep.subr.mxu0 0.0
  %2071 = vmatpush1.xpose.msra.mxu0 0.0
  %2072 = vmatprep.subr.mxu0 0.0
  %2073 = vmatpush1.xpose.msra.mxu0 0.0
  %2074 = vmatprep.subr.mxu0 0.0
  %2075 = vmatpush1.xpose.msra.mxu0 0.0
  %2076 = vmatprep.subr.mxu0 0.0
  %2077 = vmatpush1.xpose.msra.mxu0 0.0
  %2078 = vmatprep.subr.mxu0 0.0
  %2079 = vmatpush1.xpose.msra.mxu0 0.0
  %2080 = vmatprep.subr.mxu0 0.0
  %2081 = vmatpush1.xpose.msra.mxu0 0.0
  %2082 = vmatprep.subr.mxu0 0.0
  %2083 = vmatpush1.xpose.msra.mxu0 0.0
  %2084 = vmatprep.subr.mxu0 0.0
  %2085 = vmatpush1.xpose.msra.mxu0 0.0
  %2086 = vmatprep.subr.mxu0 0.0
  %2087 = vmatpush1.xpose.msra.mxu0 0.0
  %2088 = vmatprep.subr.mxu0 0.0
  %2089 = vmatpush1.xpose.msra.mxu0 0.0
  %2090 = vmatprep.subr.mxu0 0.0
  %2091 = vmatpush1.xpose.msra.mxu0 0.0
  %2092 = vmatprep.subr.mxu0 0.0
  %2093 = vmatpush1.xpose.msra.mxu0 0.0
  %2094 = vmatprep.subr.mxu0 0.0
  %2095 = vmatpush1.xpose.msra.mxu0 0.0
  %2096 = vmatprep.mubr.f32.mxu0 0.0
  %2097 = vmatmul.mubr.f32.gmra.mrb[0].mxu0 %v2026
  %v2098 = vpop.f32.mrb[0].mxu0
  %v2099 = vadd.f32 0.0, %v2098
  %v2100 = vpop.f32.mrb[0].mxu0
  %2101 = vdwg.mxu0
  %v2102 = vmul.f32 %v2099, 0.17677669
  %v2103 = vsel %vm1922, %v2102, -inf
  %2104 = vmax.xlane.f32.xlu0 %v2103
  %v2105 = vpop.xlane.xlu0 %2104
  %v2106 = vsub.f32 %v2102, %v2105
  %v2107 = vmul.f32 %v2106, 1.442695
  %v2108 = vpow.pop %v2107
  %v2109 = vsel %vm1922, %v2108, 0.0
  %2110 = vadd.xlane.f32.xlu0 %v2109
  %v2111 = vpop.xlane.xlu0 %2110
  %v2112 = vrcp.pop %v2111
  %v2113 = vmul.f32 %v2108, %v2112
  %v2115 = vsel %vm1922, %v2113, 0
  %2117 = vmatprep.subr.mxu0 0.0
  %2118 = vmatpush1.msra.mxu0 %v1664
  %2119 = vmatprep.subr.mxu0 0.0
  %2120 = vmatpush1.msra.mxu0 %v1665
  %2121 = vmatprep.subr.mxu0 0.0
  %2122 = vmatpush1.msra.mxu0 0.0
  %2123 = vmatprep.subr.mxu0 0.0
  %2124 = vmatpush1.msra.mxu0 0.0
  %2125 = vmatprep.subr.mxu0 0.0
  %2126 = vmatpush1.msra.mxu0 0.0
  %2127 = vmatprep.subr.mxu0 0.0
  %2128 = vmatpush1.msra.mxu0 0.0
  %2129 = vmatprep.subr.mxu0 0.0
  %2130 = vmatpush1.msra.mxu0 0.0
  %2131 = vmatprep.subr.mxu0 0.0
  %2132 = vmatpush1.msra.mxu0 0.0
  %2133 = vmatprep.subr.mxu0 0.0
  %2134 = vmatpush1.msra.mxu0 0.0
  %2135 = vmatprep.subr.mxu0 0.0
  %2136 = vmatpush1.msra.mxu0 0.0
  %2137 = vmatprep.subr.mxu0 0.0
  %2138 = vmatpush1.msra.mxu0 0.0
  %2139 = vmatprep.subr.mxu0 0.0
  %2140 = vmatpush1.msra.mxu0 0.0
  %2141 = vmatprep.subr.mxu0 0.0
  %2142 = vmatpush1.msra.mxu0 0.0
  %2143 = vmatprep.subr.mxu0 0.0
  %2144 = vmatpush1.msra.mxu0 0.0
  %2145 = vmatprep.subr.mxu0 0.0
  %2146 = vmatpush1.msra.mxu0 0.0
  %2147 = vmatprep.subr.mxu0 0.0
  %2148 = vmatpush1.msra.mxu0 0.0
  %2149 = vmatprep.subr.mxu0 0.0
  %2150 = vmatpush1.msra.mxu0 0.0
  %2151 = vmatprep.subr.mxu0 0.0
  %2152 = vmatpush1.msra.mxu0 0.0
  %2153 = vmatprep.subr.mxu0 0.0
  %2154 = vmatpush1.msra.mxu0 0.0
  %2155 = vmatprep.subr.mxu0 0.0
  %2156 = vmatpush1.msra.mxu0 0.0
  %2157 = vmatprep.subr.mxu0 0.0
  %2158 = vmatpush1.msra.mxu0 0.0
  %2159 = vmatprep.subr.mxu0 0.0
  %2160 = vmatpush1.msra.mxu0 0.0
  %2161 = vmatprep.subr.mxu0 0.0
  %2162 = vmatpush1.msra.mxu0 0.0
  %2163 = vmatprep.subr.mxu0 0.0
  %2164 = vmatpush1.msra.mxu0 0.0
  %2165 = vmatprep.subr.mxu0 0.0
  %2166 = vmatpush1.msra.mxu0 0.0
  %2167 = vmatprep.subr.mxu0 0.0
  %2168 = vmatpush1.msra.mxu0 0.0
  %2169 = vmatprep.subr.mxu0 0.0
  %2170 = vmatpush1.msra.mxu0 0.0
  %2171 = vmatprep.subr.mxu0 0.0
  %2172 = vmatpush1.msra.mxu0 0.0
  %2173 = vmatprep.subr.mxu0 0.0
  %2174 = vmatpush1.msra.mxu0 0.0
  %2175 = vmatprep.subr.mxu0 0.0
  %2176 = vmatpush1.msra.mxu0 0.0
  %2177 = vmatprep.subr.mxu0 0.0
  %2178 = vmatpush1.msra.mxu0 0.0
  %2179 = vmatprep.subr.mxu0 0.0
  %2180 = vmatpush1.msra.mxu0 0.0
  %2181 = vmatprep.mubr.f32.mxu0 0.0
  %2182 = vmatmul.mubr.f32.gmra.mrb[0].mxu0 %v2115
  %v2183 = vpop.f32.mrb[0].mxu0
  %v2184 = vadd.f32 0.0, %v2183
  %v2185 = vpop.f32.mrb[0].mxu0
  %2186 = vdwg.mxu0
  %v2187 = vadd.f32 %v2024, %v2184
  %v2188 = vld [vmem:[%s10] sm:$0xff]
  %v2189 = vld [vmem:[%s10 + $0x8] sm:$0xff]
  %v2190 = vld [vmem:[%s10 + $0x10] sm:$0xff]
  %v2191 = vld [vmem:[%s10 + $0x18] sm:$0xff]
  %v2192 = vld [vmem:[%s11] sm:$0x1]
  %v2194 = vlaneseq
  %v2195 = vshrl.u32 %v2194, 7
  %v2196 = vsub.s32 0, %v2195
  %v2197 = vrot.slane %v2192, %v2196
  %v2200 = vsel %vm1787, %v2187, 0
  %2202 = vmatprep.subr.mxu0 0.0
  %2203 = vmatpush1.msra.mxu0 %v2188
  %2204 = vmatprep.subr.mxu0 0.0
  %2205 = vmatpush1.msra.mxu0 %v2189
  %2206 = vmatprep.subr.mxu0 0.0
  %2207 = vmatpush1.msra.mxu0 %v2190
  %2208 = vmatprep.subr.mxu0 0.0
  %2209 = vmatpush1.msra.mxu0 %v2191
  %2210 = vmatprep.subr.mxu0 0.0
  %2211 = vmatpush1.msra.mxu0 0.0
  %2212 = vmatprep.subr.mxu0 0.0
  %2213 = vmatpush1.msra.mxu0 0.0
  %2214 = vmatprep.subr.mxu0 0.0
  %2215 = vmatpush1.msra.mxu0 0.0
  %2216 = vmatprep.subr.mxu0 0.0
  %2217 = vmatpush1.msra.mxu0 0.0
  %2218 = vmatprep.subr.mxu0 0.0
  %2219 = vmatpush1.msra.mxu0 0.0
  %2220 = vmatprep.subr.mxu0 0.0
  %2221 = vmatpush1.msra.mxu0 0.0
  %2222 = vmatprep.subr.mxu0 0.0
  %2223 = vmatpush1.msra.mxu0 0.0
  %2224 = vmatprep.subr.mxu0 0.0
  %2225 = vmatpush1.msra.mxu0 0.0
  %2226 = vmatprep.subr.mxu0 0.0
  %2227 = vmatpush1.msra.mxu0 0.0
  %2228 = vmatprep.subr.mxu0 0.0
  %2229 = vmatpush1.msra.mxu0 0.0
  %2230 = vmatprep.subr.mxu0 0.0
  %2231 = vmatpush1.msra.mxu0 0.0
  %2232 = vmatprep.subr.mxu0 0.0
  %2233 = vmatpush1.msra.mxu0 0.0
  %2234 = vmatprep.subr.mxu0 0.0
  %2235 = vmatpush1.msra.mxu0 0.0
  %2236 = vmatprep.subr.mxu0 0.0
  %2237 = vmatpush1.msra.mxu0 0.0
  %2238 = vmatprep.subr.mxu0 0.0
  %2239 = vmatpush1.msra.mxu0 0.0
  %2240 = vmatprep.subr.mxu0 0.0
  %2241 = vmatpush1.msra.mxu0 0.0
  %2242 = vmatprep.subr.mxu0 0.0
  %2243 = vmatpush1.msra.mxu0 0.0
  %2244 = vmatprep.subr.mxu0 0.0
  %2245 = vmatpush1.msra.mxu0 0.0
  %2246 = vmatprep.subr.mxu0 0.0
  %2247 = vmatpush1.msra.mxu0 0.0
  %2248 = vmatprep.subr.mxu0 0.0
  %2249 = vmatpush1.msra.mxu0 0.0
  %2250 = vmatprep.subr.mxu0 0.0
  %2251 = vmatpush1.msra.mxu0 0.0
  %2252 = vmatprep.subr.mxu0 0.0
  %2253 = vmatpush1.msra.mxu0 0.0
  %2254 = vmatprep.subr.mxu0 0.0
  %2255 = vmatpush1.msra.mxu0 0.0
  %2256 = vmatprep.subr.mxu0 0.0
  %2257 = vmatpush1.msra.mxu0 0.0
  %2258 = vmatprep.subr.mxu0 0.0
  %2259 = vmatpush1.msra.mxu0 0.0
  %2260 = vmatprep.subr.mxu0 0.0
  %2261 = vmatpush1.msra.mxu0 0.0
  %2262 = vmatprep.subr.mxu0 0.0
  %2263 = vmatpush1.msra.mxu0 0.0
  %2264 = vmatprep.subr.mxu0 0.0
  %2265 = vmatpush1.msra.mxu0 0.0
  %2266 = vmatprep.mubr.f32.mxu0 0.0
  %2267 = vmatmul.mubr.f32.gmra.mrb[0].mxu0 %v2200
  %v2268 = vpop.f32.mrb[0].mxu0
  %v2269 = vadd.f32 %v2197, %v2268
  %v2270 = vpop.f32.mrb[0].mxu0
  %2271 = vdwg.mxu0
  %v2272 = vlaneseq
  %v2273 = vand.u32 %v2272, 127
  %v2274 = vsub.f32 0.0, %v2269
  %v2275 = vmul.f32 %v2274, 1.442695
  %v2276 = vpow.pop %v2275
  %v2277 = vadd.f32 %v2276, 1.0
  %v2278 = vrcp.pop %v2277
  %v2279 = vmul.f32 1.0, %v2278
  %vm2280 = vcmp.ge.s32.totalorder %v2273, 6
  %vm2281 = vcmp.lt.s32.totalorder %v2273, 8
  %vm2282 = vmand %vm2280, %vm2281
  %v2283 = vsel %vm2282, %v2279, %v2269
  %v2284 = vsel %vm1787, %v1666, 0
  %v2286 = vsel %vm1787, %v1667, 0
  %2288 = vmatprep.subr.mxu0 0.0
  %2289 = vmatpush1.xpose.msra.mxu0 %v2284
  %2290 = vmatprep.subr.mxu0 0.0
  %2291 = vmatpush1.xpose.msra.mxu0 %v2286
  %2292 = vmatprep.subr.mxu0 0.0
  %2293 = vmatpush1.xpose.msra.mxu0 0.0
  %2294 = vmatprep.subr.mxu0 0.0
  %2295 = vmatpush1.xpose.msra.mxu0 0.0
  %2296 = vmatprep.subr.mxu0 0.0
  %2297 = vmatpush1.xpose.msra.mxu0 0.0
  %2298 = vmatprep.subr.mxu0 0.0
  %2299 = vmatpush1.xpose.msra.mxu0 0.0
  %2300 = vmatprep.subr.mxu0 0.0
  %2301 = vmatpush1.xpose.msra.mxu0 0.0
  %2302 = vmatprep.subr.mxu0 0.0
  %2303 = vmatpush1.xpose.msra.mxu0 0.0
  %2304 = vmatprep.subr.mxu0 0.0
  %2305 = vmatpush1.xpose.msra.mxu0 0.0
  %2306 = vmatprep.subr.mxu0 0.0
  %2307 = vmatpush1.xpose.msra.mxu0 0.0
  %2308 = vmatprep.subr.mxu0 0.0
  %2309 = vmatpush1.xpose.msra.mxu0 0.0
  %2310 = vmatprep.subr.mxu0 0.0
  %2311 = vmatpush1.xpose.msra.mxu0 0.0
  %2312 = vmatprep.subr.mxu0 0.0
  %2313 = vmatpush1.xpose.msra.mxu0 0.0
  %2314 = vmatprep.subr.mxu0 0.0
  %2315 = vmatpush1.xpose.msra.mxu0 0.0
  %2316 = vmatprep.subr.mxu0 0.0
  %2317 = vmatpush1.xpose.msra.mxu0 0.0
  %2318 = vmatprep.subr.mxu0 0.0
  %2319 = vmatpush1.xpose.msra.mxu0 0.0
  %2320 = vmatprep.subr.mxu0 0.0
  %2321 = vmatpush1.xpose.msra.mxu0 0.0
  %2322 = vmatprep.subr.mxu0 0.0
  %2323 = vmatpush1.xpose.msra.mxu0 0.0
  %2324 = vmatprep.subr.mxu0 0.0
  %2325 = vmatpush1.xpose.msra.mxu0 0.0
  %2326 = vmatprep.subr.mxu0 0.0
  %2327 = vmatpush1.xpose.msra.mxu0 0.0
  %2328 = vmatprep.subr.mxu0 0.0
  %2329 = vmatpush1.xpose.msra.mxu0 0.0
  %2330 = vmatprep.subr.mxu0 0.0
  %2331 = vmatpush1.xpose.msra.mxu0 0.0
  %2332 = vmatprep.subr.mxu0 0.0
  %2333 = vmatpush1.xpose.msra.mxu0 0.0
  %2334 = vmatprep.subr.mxu0 0.0
  %2335 = vmatpush1.xpose.msra.mxu0 0.0
  %2336 = vmatprep.subr.mxu0 0.0
  %2337 = vmatpush1.xpose.msra.mxu0 0.0
  %2338 = vmatprep.subr.mxu0 0.0
  %2339 = vmatpush1.xpose.msra.mxu0 0.0
  %2340 = vmatprep.subr.mxu0 0.0
  %2341 = vmatpush1.xpose.msra.mxu0 0.0
  %2342 = vmatprep.subr.mxu0 0.0
  %2343 = vmatpush1.xpose.msra.mxu0 0.0
  %2344 = vmatprep.subr.mxu0 0.0
  %2345 = vmatpush1.xpose.msra.mxu0 0.0
  %2346 = vmatprep.subr.mxu0 0.0
  %2347 = vmatpush1.xpose.msra.mxu0 0.0
  %2348 = vmatprep.subr.mxu0 0.0
  %2349 = vmatpush1.xpose.msra.mxu0 0.0
  %2350 = vmatprep.subr.mxu0 0.0
  %2351 = vmatpush1.xpose.msra.mxu0 0.0
  %2352 = vmatprep.mubr.f32.mxu0 0.0
  %2353 = vmatmul.mubr.f32.gmra.mrb[0].mxu0 %v2026
  %v2354 = vpop.f32.mrb[0].mxu0
  %v2355 = vadd.f32 0.0, %v2354
  %v2356 = vpop.f32.mrb[0].mxu0
  %2357 = vdwg.mxu0
  %v2358 = vmul.f32 %v2355, 0.17677669
  %v2359 = vsel %vm1922, %v2358, -inf
  %2360 = vmax.xlane.f32.xlu0 %v2359
  %v2361 = vpop.xlane.xlu0 %2360
  %v2362 = vsub.f32 %v2358, %v2361
  %v2363 = vmul.f32 %v2362, 1.442695
  %v2364 = vpow.pop %v2363
  %v2365 = vsel %vm1922, %v2364, 0.0
  %2366 = vadd.xlane.f32.xlu0 %v2365
  %v2367 = vpop.xlane.xlu0 %2366
  %v2368 = vrcp.pop %v2367
  %v2369 = vmul.f32 %v2364, %v2368
  %v2371 = vsel %vm1922, %v2369, 0
  %2373 = vmatprep.subr.mxu0 0.0
  %2374 = vmatpush1.msra.mxu0 %v1666
  %2375 = vmatprep.subr.mxu0 0.0
  %2376 = vmatpush1.msra.mxu0 %v1667
  %2377 = vmatprep.subr.mxu0 0.0
  %2378 = vmatpush1.msra.mxu0 0.0
  %2379 = vmatprep.subr.mxu0 0.0
  %2380 = vmatpush1.msra.mxu0 0.0
  %2381 = vmatprep.subr.mxu0 0.0
  %2382 = vmatpush1.msra.mxu0 0.0
  %2383 = vmatprep.subr.mxu0 0.0
  %2384 = vmatpush1.msra.mxu0 0.0
  %2385 = vmatprep.subr.mxu0 0.0
  %2386 = vmatpush1.msra.mxu0 0.0
  %2387 = vmatprep.subr.mxu0 0.0
  %2388 = vmatpush1.msra.mxu0 0.0
  %2389 = vmatprep.subr.mxu0 0.0
  %2390 = vmatpush1.msra.mxu0 0.0
  %2391 = vmatprep.subr.mxu0 0.0
  %2392 = vmatpush1.msra.mxu0 0.0
  %2393 = vmatprep.subr.mxu0 0.0
  %2394 = vmatpush1.msra.mxu0 0.0
  %2395 = vmatprep.subr.mxu0 0.0
  %2396 = vmatpush1.msra.mxu0 0.0
  %2397 = vmatprep.subr.mxu0 0.0
  %2398 = vmatpush1.msra.mxu0 0.0
  %2399 = vmatprep.subr.mxu0 0.0
  %2400 = vmatpush1.msra.mxu0 0.0
  %2401 = vmatprep.subr.mxu0 0.0
  %2402 = vmatpush1.msra.mxu0 0.0
  %2403 = vmatprep.subr.mxu0 0.0
  %2404 = vmatpush1.msra.mxu0 0.0
  %2405 = vmatprep.subr.mxu0 0.0
  %2406 = vmatpush1.msra.mxu0 0.0
  %2407 = vmatprep.subr.mxu0 0.0
  %2408 = vmatpush1.msra.mxu0 0.0
  %2409 = vmatprep.subr.mxu0 0.0
  %2410 = vmatpush1.msra.mxu0 0.0
  %2411 = vmatprep.subr.mxu0 0.0
  %2412 = vmatpush1.msra.mxu0 0.0
  %2413 = vmatprep.subr.mxu0 0.0
  %2414 = vmatpush1.msra.mxu0 0.0
  %2415 = vmatprep.subr.mxu0 0.0
  %2416 = vmatpush1.msra.mxu0 0.0
  %2417 = vmatprep.subr.mxu0 0.0
  %2418 = vmatpush1.msra.mxu0 0.0
  %2419 = vmatprep.subr.mxu0 0.0
  %2420 = vmatpush1.msra.mxu0 0.0
  %2421 = vmatprep.subr.mxu0 0.0
  %2422 = vmatpush1.msra.mxu0 0.0
  %2423 = vmatprep.subr.mxu0 0.0
  %2424 = vmatpush1.msra.mxu0 0.0
  %2425 = vmatprep.subr.mxu0 0.0
  %2426 = vmatpush1.msra.mxu0 0.0
  %2427 = vmatprep.subr.mxu0 0.0
  %2428 = vmatpush1.msra.mxu0 0.0
  %2429 = vmatprep.subr.mxu0 0.0
  %2430 = vmatpush1.msra.mxu0 0.0
  %2431 = vmatprep.subr.mxu0 0.0
  %2432 = vmatpush1.msra.mxu0 0.0
  %2433 = vmatprep.subr.mxu0 0.0
  %2434 = vmatpush1.msra.mxu0 0.0
  %2435 = vmatprep.subr.mxu0 0.0
  %2436 = vmatpush1.msra.mxu0 0.0
  %2437 = vmatprep.mubr.f32.mxu0 0.0
  %2438 = vmatmul.mubr.f32.gmra.mrb[0].mxu0 %v2371
  %v2439 = vpop.f32.mrb[0].mxu0
  %v2440 = vadd.f32 0.0, %v2439
  %v2441 = vpop.f32.mrb[0].mxu0
  %2442 = vdwg.mxu0
  %v2443 = vadd.f32 %v2024, %v2440
  %v2445 = vsel %vm1787, %v2443, 0
  %2447 = vmatprep.subr.mxu0 0.0
  %2448 = vmatpush1.msra.mxu0 %v2188
  %2449 = vmatprep.subr.mxu0 0.0
  %2450 = vmatpush1.msra.mxu0 %v2189
  %2451 = vmatprep.subr.mxu0 0.0
  %2452 = vmatpush1.msra.mxu0 %v2190
  %2453 = vmatprep.subr.mxu0 0.0
  %2454 = vmatpush1.msra.mxu0 %v2191
  %2455 = vmatprep.subr.mxu0 0.0
  %2456 = vmatpush1.msra.mxu0 0.0
  %2457 = vmatprep.subr.mxu0 0.0
  %2458 = vmatpush1.msra.mxu0 0.0
  %2459 = vmatprep.subr.mxu0 0.0
  %2460 = vmatpush1.msra.mxu0 0.0
  %2461 = vmatprep.subr.mxu0 0.0
  %2462 = vmatpush1.msra.mxu0 0.0
  %2463 = vmatprep.subr.mxu0 0.0
  %2464 = vmatpush1.msra.mxu0 0.0
  %2465 = vmatprep.subr.mxu0 0.0
  %2466 = vmatpush1.msra.mxu0 0.0
  %2467 = vmatprep.subr.mxu0 0.0
  %2468 = vmatpush1.msra.mxu0 0.0
  %2469 = vmatprep.subr.mxu0 0.0
  %2470 = vmatpush1.msra.mxu0 0.0
  %2471 = vmatprep.subr.mxu0 0.0
  %2472 = vmatpush1.msra.mxu0 0.0
  %2473 = vmatprep.subr.mxu0 0.0
  %2474 = vmatpush1.msra.mxu0 0.0
  %2475 = vmatprep.subr.mxu0 0.0
  %2476 = vmatpush1.msra.mxu0 0.0
  %2477 = vmatprep.subr.mxu0 0.0
  %2478 = vmatpush1.msra.mxu0 0.0
  %2479 = vmatprep.subr.mxu0 0.0
  %2480 = vmatpush1.msra.mxu0 0.0
  %2481 = vmatprep.subr.mxu0 0.0
  %2482 = vmatpush1.msra.mxu0 0.0
  %2483 = vmatprep.subr.mxu0 0.0
  %2484 = vmatpush1.msra.mxu0 0.0
  %2485 = vmatprep.subr.mxu0 0.0
  %2486 = vmatpush1.msra.mxu0 0.0
  %2487 = vmatprep.subr.mxu0 0.0
  %2488 = vmatpush1.msra.mxu0 0.0
  %2489 = vmatprep.subr.mxu0 0.0
  %2490 = vmatpush1.msra.mxu0 0.0
  %2491 = vmatprep.subr.mxu0 0.0
  %2492 = vmatpush1.msra.mxu0 0.0
  %2493 = vmatprep.subr.mxu0 0.0
  %2494 = vmatpush1.msra.mxu0 0.0
  %2495 = vmatprep.subr.mxu0 0.0
  %2496 = vmatpush1.msra.mxu0 0.0
  %2497 = vmatprep.subr.mxu0 0.0
  %2498 = vmatpush1.msra.mxu0 0.0
  %2499 = vmatprep.subr.mxu0 0.0
  %2500 = vmatpush1.msra.mxu0 0.0
  %2501 = vmatprep.subr.mxu0 0.0
  %2502 = vmatpush1.msra.mxu0 0.0
  %2503 = vmatprep.subr.mxu0 0.0
  %2504 = vmatpush1.msra.mxu0 0.0
  %2505 = vmatprep.subr.mxu0 0.0
  %2506 = vmatpush1.msra.mxu0 0.0
  %2507 = vmatprep.subr.mxu0 0.0
  %2508 = vmatpush1.msra.mxu0 0.0
  %2509 = vmatprep.subr.mxu0 0.0
  %2510 = vmatpush1.msra.mxu0 0.0
  %2511 = vmatprep.mubr.f32.mxu0 0.0
  %2512 = vmatmul.mubr.f32.gmra.mrb[0].mxu0 %v2445
  %v2513 = vpop.f32.mrb[0].mxu0
  %v2514 = vadd.f32 %v2197, %v2513
  %v2515 = vpop.f32.mrb[0].mxu0
  %2516 = vdwg.mxu0
  %v2517 = vsub.f32 0.0, %v2514
  %v2518 = vmul.f32 %v2517, 1.442695
  %v2519 = vpow.pop %v2518
  %v2520 = vadd.f32 %v2519, 1.0
  %v2521 = vrcp.pop %v2520
  %v2522 = vmul.f32 1.0, %v2521
  %v2523 = vsel %vm2282, %v2522, %v2514
  %2524 = vst [vmem:[%s13] sm:$0xff] %v2283
  %2525 = vst [vmem:[%s13 + $0x8] sm:$0xff] %v2523
  // Predicated region
  $region50: #{pointtad_forward.1} parent=0 // pred_check
    _
  $region51: #{pointtad_forward.1} parent=0 // pred_check_branch
    %2527 = sbr.rel (0) target = $region53
  $region52: #{pointtad_forward.1} parent=0 // pred_region
    _
  $region53: #{pointtad_forward.1} parent=0 // pred_fallthru
    _
  // Predicated region
  $region54: #{pointtad_forward.1} parent=0 // pred_check
    _
  $region55: #{pointtad_forward.1} parent=0 // pred_check_branch
    %2529 = sbr.rel (0) target = $region57
  $region56: #{pointtad_forward.1} parent=0 // pred_region
    _
  $region57: #{pointtad_forward.1} parent=0 // pred_fallthru
    _
  // Predicated region
  $region58: #{pointtad_forward.1} parent=0 // pred_check
    _
  $region59: #{pointtad_forward.1} parent=0 // pred_check_branch
    %2531 = sbr.rel (0) target = $region61
  $region60: #{pointtad_forward.1} parent=0 // pred_region
    _
  $region61: #{pointtad_forward.1} parent=0 // pred_fallthru
    _
  // Predicated region
  $region62: #{pointtad_forward.1} parent=0 // pred_check
    _
  $region63: #{pointtad_forward.1} parent=0 // pred_check_branch
    %2533 = sbr.rel (0) target = $region65
  $region64: #{pointtad_forward.1} parent=0 // pred_region
    _
  $region65: #{pointtad_forward.1} parent=0 // pred_fallthru
    _

</llo_original>
